<compile_context>
chip_gen: v7x
topology: tpu7x:2x2x1
jax: 0.10.0
libtpu: 0.0.40
codegen_flags: <defaults>
</compile_context>

<pallas_src>
import jax
import jax.numpy as jnp
from jax import lax
from jax.experimental import pallas as pl
from jax.experimental.pallas import tpu as pltpu

EPS = 1e-5  # torch.nn.LayerNorm default


def _layernorm(y, gamma, beta):
    mu = jnp.mean(y, axis=-1, keepdims=True)
    var = jnp.mean((y - mu) ** 2, axis=-1, keepdims=True)
    return (y - mu) * lax.rsqrt(var + EPS) * gamma + beta


# ----------------------------- fused kernel -----------------------------

def processor_kernel(
    # connectivity (int32, tiny, only read at iteration 0)
    s_col_ref, r_col_ref, r_row_ref,
    # initial node/edge features, raw HBM refs (copied once at iteration 0)
    node_in_hbm, edge_in_hbm,
    # per-iteration bf16 weights (leading T axis pipelined via BlockSpec)
    ew1sr_ref, ew1e_ref, ew2_ref, ew3_ref,
    nw1n_ref, nw1e_ref, nw2_ref, nw3_ref,
    # one fp32 slab with all biases / LayerNorm gamma,beta for this iteration
    bias_ref,
    # outputs = message-passing state, resident in VMEM across the whole grid
    node_out_ref, edge_out_ref,
    # VMEM scratch: loop-invariant masks + init DMA semaphores
    sr_mask_ref, r_mask_t_ref, init_sem,
):
    it = pl.program_id(0)
    N, D = node_out_ref.shape
    E = edge_out_ref.shape[0]
    H = ew2_ref.shape[0]
    f32 = jnp.float32
    bf16 = jnp.bfloat16

    # ---- one-time init: copy initial state in, build loop-invariant masks ----
    @pl.when(it == 0)
    def _init():
        cp_n = pltpu.make_async_copy(node_in_hbm, node_out_ref, init_sem.at[0])
        cp_e = pltpu.make_async_copy(edge_in_hbm, edge_out_ref, init_sem.at[1])
        cp_n.start()
        cp_e.start()
        # Fused sender|receiver gather mask (E, 2N): column s_e and N + r_e are 1.
        iota_sr = lax.broadcasted_iota(jnp.int32, (E, 2 * N), 1)
        sr_mask_ref[...] = ((iota_sr == s_col_ref[...])
                            | (iota_sr == (r_col_ref[...] + N))).astype(bf16)
        # Scatter-add mask (N, E): row n selects edges whose receiver is n.
        iota_ne = lax.broadcasted_iota(jnp.int32, (N, E), 0)
        r_mask_t_ref[...] = (iota_ne == r_row_ref[...]).astype(bf16)
        cp_n.wait()
        cp_e.wait()

    node = node_out_ref[...]            # (N, D) fp32 state from previous round
    edge = edge_out_ref[...]            # (E, D) fp32 state
    node_b = node.astype(bf16)
    edge_b = edge.astype(bf16)

    # biases / LayerNorm params (fp32), one packed slab per iteration
    bias = bias_ref[...]                # (16, C)
    eb1, eb2 = bias[0:1, :H], bias[1:2, :H]
    eb3, eg, ebt = bias[2:3, :D], bias[3:4, :D], bias[4:5, :D]
    nb1, nb2 = bias[5:6, :H], bias[6:7, :H]
    nb3, ng, nbt = bias[7:8, :D], bias[8:9, :D], bias[9:10, :D]

    # ---- EdgeProcessor: MLP(cat[snd, rcv, edge]) with split W1 ----
    # cat[snd, rcv] @ W1_sr == sr_mask @ stack_rows(node @ W1_s, node @ W1_r)
    p = jnp.dot(node_b, ew1sr_ref[...], preferred_element_type=f32)    # (N, 2H)
    p_stack = jnp.concatenate([p[:, :H], p[:, H:]], axis=0).astype(bf16)  # (2N, H)
    h = (jnp.dot(sr_mask_ref[...], p_stack, preferred_element_type=f32)
         + jnp.dot(edge_b, ew1e_ref[...], preferred_element_type=f32)
         + eb1)
    h = jnp.maximum(h, 0.0)
    h = jnp.maximum(
        jnp.dot(h.astype(bf16), ew2_ref[...], preferred_element_type=f32) + eb2,
        0.0)
    y = jnp.dot(h.astype(bf16), ew3_ref[...], preferred_element_type=f32) + eb3
    e_new = _layernorm(y, eg, ebt)      # (E, D) fp32; NO edge residual (matches spec)
    edge_out_ref[...] = e_new

    # ---- NodeProcessor: MLP(cat[node, scatter_add(e_new)]) + residual ----
    q = jnp.dot(e_new.astype(bf16), nw1e_ref[...],
                preferred_element_type=f32)                            # (E, H)
    agg = jnp.dot(r_mask_t_ref[...], q.astype(bf16),
                  preferred_element_type=f32)                          # (N, H)
    h = jnp.dot(node_b, nw1n_ref[...], preferred_element_type=f32) + agg + nb1
    h = jnp.maximum(h, 0.0)
    h = jnp.maximum(
        jnp.dot(h.astype(bf16), nw2_ref[...], preferred_element_type=f32) + nb2,
        0.0)
    y = jnp.dot(h.astype(bf16), nw3_ref[...], preferred_element_type=f32) + nb3
    node_out_ref[...] = _layernorm(y, ng, nbt) + node


# ----------------------------- wrapper -----------------------------

def _vmem_bytes_estimate(N, E, D, H, C):
    state = 4 * (N + E) * D
    masks = 2 * (E * 2 * N + N * E)
    weights_bf16 = 2 * (D * 2 * H + 3 * D * H + 2 * H * H + 2 * H * D)
    biases = 4 * 16 * C
    acts = 4 * (N * 2 * H + 2 * N * H + 3 * E * H + 2 * E * D + 2 * N * H + N * D)
    idx = 4 * 3 * E
    # weights/biases double-buffered by the pipeline
    return state + masks + 2 * (weights_bf16 + biases) + acts + idx


@jax.jit
def processor_forward(node_feat, edge_index, edge_feat, packed):
    N, D = node_feat.shape
    E = edge_feat.shape[0]
    T = packed["ew2"].shape[0]
    H = packed["ew2"].shape[-1]
    C = packed["bias"].shape[-1]

    senders = edge_index[0].astype(jnp.int32)
    receivers = edge_index[1].astype(jnp.int32)
    s_col = senders.reshape(E, 1)
    r_col = receivers.reshape(E, 1)
    r_row = receivers.reshape(1, E)

    def full(shape):
        return pl.BlockSpec(shape, lambda i: (0,) * len(shape))

    def per_iter(shape):
        return pl.BlockSpec((None,) + shape, lambda i: (i,) + (0,) * len(shape))

    in_specs = [
        full((E, 1)), full((E, 1)), full((1, E)),
        pl.BlockSpec(memory_space=pl.ANY),      # initial node state stays in HBM
        pl.BlockSpec(memory_space=pl.ANY),      # initial edge state stays in HBM
        per_iter((D, 2 * H)), per_iter((D, H)), per_iter((H, H)), per_iter((H, D)),
        per_iter((D, H)), per_iter((D, H)), per_iter((H, H)), per_iter((H, D)),
        per_iter((16, C)),
    ]
    out_specs = [full((N, D)), full((E, D))]
    scratch_shapes = [
        pltpu.VMEM((E, 2 * N), jnp.bfloat16),   # fused sender|receiver gather mask
        pltpu.VMEM((N, E), jnp.bfloat16),       # receiver scatter-add mask
        pltpu.SemaphoreType.DMA((2,)),          # init-copy semaphores
    ]

    flops_iter = 2 * (N * D * 2 * H + E * 2 * N * H + E * D * H + E * H * H
                      + E * H * D + E * D * H + N * E * H + N * D * H
                      + N * H * H + N * H * D)
    weight_bytes = 2 * T * (D * 2 * H + 3 * D * H + 2 * H * H + 2 * H * D)
    cost = pl.CostEstimate(
        flops=int(T * flops_iter),
        transcendentals=int(T * (E + N)),
        bytes_accessed=int(weight_bytes + 4 * T * 16 * C
                           + 2 * 4 * (N + E) * D + 4 * 3 * E),
    )

    vmem_limit = int(min(max(4 * _vmem_bytes_estimate(N, E, D, H, C),
                             32 * 1024 * 1024), 100 * 1024 * 1024))

    node_out, edge_out = pl.pallas_call(
        processor_kernel,
        grid=(T,),
        in_specs=in_specs,
        out_specs=out_specs,
        out_shape=[
            jax.ShapeDtypeStruct((N, D), jnp.float32),
            jax.ShapeDtypeStruct((E, D), jnp.float32),
        ],
        scratch_shapes=scratch_shapes,
        compiler_params=pltpu.CompilerParams(
            dimension_semantics=("arbitrary",),
            vmem_limit_bytes=vmem_limit),
        cost_estimate=cost,
    )(
        s_col, r_col, r_row, node_feat, edge_feat,
        packed["ew1sr"], packed["ew1e"], packed["ew2"], packed["ew3"],
        packed["nw1n"], packed["nw1e"], packed["nw2"], packed["nw3"],
        packed["bias"],
    )
    return node_out, edge_out


# ----------------------------- parameter packing -----------------------------

def pack_processor_params(params):
    """fp32 logical params -> bf16 MXU weights + one fp32 bias/LN slab."""
    bf16 = jnp.bfloat16
    D = params["ew3"].shape[-1]
    H = params["ew2"].shape[-1]
    C = max(D, H)

    def pad_row(v):  # (T, 1, W) -> (T, 1, C)
        return jnp.pad(v, ((0, 0), (0, 0), (0, C - v.shape[-1])))

    rows = [params[k] for k in ("eb1", "eb2", "eb3", "egamma", "ebeta",
                                "nb1", "nb2", "nb3", "ngamma", "nbeta")]
    slab = jnp.concatenate([pad_row(r) for r in rows], axis=1)        # (T, 10, C)
    slab = jnp.pad(slab, ((0, 0), (0, 16 - slab.shape[1]), (0, 0)))   # (T, 16, C)

    return {
        "ew1sr": jnp.concatenate([params["ew1s"], params["ew1r"]],
                                 axis=-1).astype(bf16),               # (T, D, 2H)
        "ew1e": params["ew1e"].astype(bf16),
        "ew2": params["ew2"].astype(bf16),
        "ew3": params["ew3"].astype(bf16),
        "nw1n": params["nw1n"].astype(bf16),
        "nw1e": params["nw1e"].astype(bf16),
        "nw2": params["nw2"].astype(bf16),
        "nw3": params["nw3"].astype(bf16),
        "bias": slab.astype(jnp.float32),
    }


# ----------------------------- reference (pure JAX, fp32) -----------------------------

def processor_reference(node_feat, edge_index, edge_feat, params):
    senders, receivers = edge_index[0], edge_index[1]
    N = node_feat.shape[0]
    T = params["ew1s"].shape[0]

    def ln(y, g, b):
        mu = jnp.mean(y, -1, keepdims=True)
        var = jnp.mean((y - mu) ** 2, -1, keepdims=True)
        return (y - mu) * lax.rsqrt(var + EPS) * g + b

    for t in range(T):
        snd = node_feat[senders]
        rcv = node_feat[receivers]
        h = (snd @ params["ew1s"][t] + rcv @ params["ew1r"][t]
             + edge_feat @ params["ew1e"][t] + params["eb1"][t])
        h = jnp.maximum(h, 0.0)
        h = jnp.maximum(h @ params["ew2"][t] + params["eb2"][t], 0.0)
        e = ln(h @ params["ew3"][t] + params["eb3"][t],
               params["egamma"][t], params["ebeta"][t])
        agg = jnp.zeros((N, e.shape[-1]), e.dtype).at[receivers].add(e)
        h = (node_feat @ params["nw1n"][t] + agg @ params["nw1e"][t]
             + params["nb1"][t])
        h = jnp.maximum(h, 0.0)
        h = jnp.maximum(h @ params["nw2"][t] + params["nb2"][t], 0.0)
        node_feat = ln(h @ params["nw3"][t] + params["nb3"][t],
                       params["ngamma"][t], params["nbeta"][t]) + node_feat
        edge_feat = e
    return node_feat, edge_feat


# ----------------------------- parameter init -----------------------------

def init_processor_params(key, num_iterations, D, H):
    T = num_iterations

    def rnd(k, shape):
        return 0.05 * jax.random.normal(k, shape, jnp.float32)

    ks = jax.random.split(key, 15)
    return {
        # EdgeProcessor MLP (first-layer weight pre-split: sender / receiver / edge)
        "ew1s": rnd(ks[0], (T, D, H)),
        "ew1r": rnd(ks[1], (T, D, H)),
        "ew1e": rnd(ks[2], (T, D, H)),
        "eb1": rnd(ks[3], (T, 1, H)),
        "ew2": rnd(ks[4], (T, H, H)),
        "eb2": rnd(ks[5], (T, 1, H)),
        "ew3": rnd(ks[6], (T, H, D)),
        "eb3": rnd(ks[7], (T, 1, D)),
        "egamma": jnp.ones((T, 1, D), jnp.float32),
        "ebeta": jnp.zeros((T, 1, D), jnp.float32),
        # NodeProcessor MLP (first-layer weight pre-split: node / aggregated-edge)
        "nw1n": rnd(ks[8], (T, D, H)),
        "nw1e": rnd(ks[9], (T, D, H)),
        "nb1": rnd(ks[10], (T, 1, H)),
        "nw2": rnd(ks[11], (T, H, H)),
        "nb2": rnd(ks[12], (T, 1, H)),
        "nw3": rnd(ks[13], (T, H, D)),
        "nb3": rnd(ks[14], (T, 1, D)),
        "ngamma": jnp.ones((T, 1, D), jnp.float32),
        "nbeta": jnp.zeros((T, 1, D), jnp.float32),
    }


# ----------------------------- main -----------------------------

if __name__ == "__main__":
    # small shapes: 16 nodes, 32 edges, feature dim 128 (lane-aligned), 2 iterations
    N_NODE, N_EDGE, D, HIDDEN = 16, 32, 128, 128
    NUM_ITERATIONS = 2

    key = jax.random.PRNGKey(0)
    k_nf, k_ef, k_s, k_r, k_p = jax.random.split(key, 5)

    node_feature = jax.random.normal(k_nf, (N_NODE, D), jnp.float32)
    edge_feature = jax.random.normal(k_ef, (N_EDGE, D), jnp.float32)
    senders = jax.random.randint(k_s, (N_EDGE,), 0, N_NODE, jnp.int32)
    receivers = jax.random.randint(k_r, (N_EDGE,), 0, N_NODE, jnp.int32)
    edge_index = jnp.stack([senders, receivers], axis=0)  # (2, N_edge)

    params = init_processor_params(k_p, NUM_ITERATIONS, D, HIDDEN)
    packed = pack_processor_params(params)   # bf16 MXU weights + fp32 bias slab

    node_out, edge_out = processor_forward(node_feature, edge_index,
                                           edge_feature, packed)
    node_out = jax.block_until_ready(node_out)
    edge_out = jax.block_until_ready(edge_out)

    assert node_out.shape == (N_NODE, D) and edge_out.shape == (N_EDGE, D)
    assert jnp.all(jnp.isfinite(node_out)) and jnp.all(jnp.isfinite(edge_out))

    # correctness check against a pure-JAX fp32 reference of the PyTorch module
    # (tolerance accounts for bf16 MXU operands in the kernel)
    node_ref, edge_ref = processor_reference(node_feature, edge_index,
                                             edge_feature, params)
    assert jnp.allclose(node_out, node_ref, rtol=2e-2, atol=2e-2)
    assert jnp.allclose(edge_out, edge_ref, rtol=2e-2, atol=2e-2)

    print("KERNEL_OK")
</pallas_src>

<mosaic_0001>
module attributes {stable_mosaic.version = 11 : i64} {
  func.func @processor_kernel(%arg0: i32, %arg1: memref<32x1xi32, #tpu.memory_space<vmem>>, %arg2: memref<32x1xi32, #tpu.memory_space<vmem>>, %arg3: memref<1x32xi32, #tpu.memory_space<vmem>>, %arg4: memref<16x128xf32, #tpu.memory_space<any>>, %arg5: memref<32x128xf32, #tpu.memory_space<any>>, %arg6: memref<1x128x256xbf16, #tpu.memory_space<vmem>>, %arg7: memref<1x128x128xbf16, #tpu.memory_space<vmem>>, %arg8: memref<1x128x128xbf16, #tpu.memory_space<vmem>>, %arg9: memref<1x128x128xbf16, #tpu.memory_space<vmem>>, %arg10: memref<1x128x128xbf16, #tpu.memory_space<vmem>>, %arg11: memref<1x128x128xbf16, #tpu.memory_space<vmem>>, %arg12: memref<1x128x128xbf16, #tpu.memory_space<vmem>>, %arg13: memref<1x128x128xbf16, #tpu.memory_space<vmem>>, %arg14: memref<1x16x128xf32, #tpu.memory_space<vmem>>, %arg15: memref<16x128xf32, #tpu.memory_space<vmem>>, %arg16: memref<32x128xf32, #tpu.memory_space<vmem>>, %arg17: memref<32x32xbf16, #tpu.memory_space<vmem>>, %arg18: memref<16x32xbf16, #tpu.memory_space<vmem>>, %arg19: memref<2x!tpu.dma_semaphore, #tpu.memory_space<semaphore_mem>>) attributes {dimension_semantics = [#tpu.dimension_semantics<arbitrary>], iteration_bounds = array<i64: 2>, scalar_prefetch = 0 : i64, scratch_operands = 3 : i64, tpu.core_type = #tpu.core_type<tc>, window_params = [{pipeline_mode = #tpu.pipeline_mode<synchronous>, transform_indices = @transform_0, window_bounds = array<i64: 32, 1>}, {pipeline_mode = #tpu.pipeline_mode<synchronous>, transform_indices = @transform_1, window_bounds = array<i64: 32, 1>}, {pipeline_mode = #tpu.pipeline_mode<synchronous>, transform_indices = @transform_2, window_bounds = array<i64: 1, 32>}, {}, {}, {transform_indices = @transform_5, window_bounds = array<i64: 1, 128, 256>}, {transform_indices = @transform_6, window_bounds = array<i64: 1, 128, 128>}, {transform_indices = @transform_7, window_bounds = array<i64: 1, 128, 128>}, {transform_indices = @transform_8, window_bounds = array<i64: 1, 128, 128>}, {transform_indices = @transform_9, window_bounds = array<i64: 1, 128, 128>}, {transform_indices = @transform_10, window_bounds = array<i64: 1, 128, 128>}, {transform_indices = @transform_11, window_bounds = array<i64: 1, 128, 128>}, {transform_indices = @transform_12, window_bounds = array<i64: 1, 128, 128>}, {transform_indices = @transform_13, window_bounds = array<i64: 1, 16, 128>}, {pipeline_mode = #tpu.pipeline_mode<synchronous>, transform_indices = @transform_14, window_bounds = array<i64: 16, 128>}, {pipeline_mode = #tpu.pipeline_mode<synchronous>, transform_indices = @transform_15, window_bounds = array<i64: 32, 128>}]} {
    %c0_i32 = arith.constant 0 : i32
    %0 = arith.cmpi eq, %arg0, %c0_i32 : i32
    %1 = arith.extui %0 : i1 to i32
    %c0_i32_0 = arith.constant 0 : i32
    %2 = arith.cmpi ne, %1, %c0_i32_0 : i32
    scf.if %2 {
      %c0_i32_62 = arith.constant 0 : i32
      %126 = tpu.memref_slice %arg19[%c0_i32_62] : memref<2x!tpu.dma_semaphore, #tpu.memory_space<semaphore_mem>> -> memref<1x!tpu.dma_semaphore, #tpu.memory_space<semaphore_mem>>
      %127 = tpu.memref_squeeze %126 : memref<1x!tpu.dma_semaphore, #tpu.memory_space<semaphore_mem>> -> memref<!tpu.dma_semaphore, #tpu.memory_space<semaphore_mem>>
      tpu.enqueue_dma source(%arg4 : memref<16x128xf32, #tpu.memory_space<any>>) target(%arg15 : memref<16x128xf32, #tpu.memory_space<vmem>>) target_semaphore(%127 : memref<!tpu.dma_semaphore, #tpu.memory_space<semaphore_mem>>)
      %c1_i32 = arith.constant 1 : i32
      %128 = tpu.memref_slice %arg19[%c1_i32] : memref<2x!tpu.dma_semaphore, #tpu.memory_space<semaphore_mem>> -> memref<1x!tpu.dma_semaphore, #tpu.memory_space<semaphore_mem>>
      %129 = tpu.memref_squeeze %128 : memref<1x!tpu.dma_semaphore, #tpu.memory_space<semaphore_mem>> -> memref<!tpu.dma_semaphore, #tpu.memory_space<semaphore_mem>>
      tpu.enqueue_dma source(%arg5 : memref<32x128xf32, #tpu.memory_space<any>>) target(%arg16 : memref<32x128xf32, #tpu.memory_space<vmem>>) target_semaphore(%129 : memref<!tpu.dma_semaphore, #tpu.memory_space<semaphore_mem>>)
      %130 = tpu.iota {dimensions = array<i32: 1>} : vector<32x32xi32>
      %c0_63 = arith.constant 0 : index
      %c0_64 = arith.constant 0 : index
      %131 = vector.load %arg1[%c0_63, %c0_64] : memref<32x1xi32, #tpu.memory_space<vmem>>, vector<32x1xi32>
      %132 = vector.broadcast %131 : vector<32x1xi32> to vector<32x32xi32>
      %133 = arith.cmpi eq, %130, %132 : vector<32x32xi32>
      %c0_65 = arith.constant 0 : index
      %c0_66 = arith.constant 0 : index
      %134 = vector.load %arg2[%c0_65, %c0_66] : memref<32x1xi32, #tpu.memory_space<vmem>>, vector<32x1xi32>
      %c16_i32 = arith.constant 16 : i32
      %135 = vector.broadcast %c16_i32 : i32 to vector<32x1xi32>
      %136 = arith.addi %134, %135 : vector<32x1xi32>
      %137 = vector.broadcast %136 : vector<32x1xi32> to vector<32x32xi32>
      %138 = arith.cmpi eq, %130, %137 : vector<32x32xi32>
      %139 = arith.ori %133, %138 : vector<32x32xi1>
      %140 = arith.extui %139 : vector<32x32xi1> to vector<32x32xi32>
      %141 = arith.sitofp %140 : vector<32x32xi32> to vector<32x32xf32>
      %142 = arith.truncf %141 : vector<32x32xf32> to vector<32x32xbf16>
      %c0_67 = arith.constant 0 : index
      %c0_68 = arith.constant 0 : index
      %143 = vector.load %arg17[%c0_67, %c0_68] : memref<32x32xbf16, #tpu.memory_space<vmem>>, vector<32x32xbf16>
      tpu.vector_store %arg17[%c0_67, %c0_68], %142 {strides = array<i32>} : memref<32x32xbf16, #tpu.memory_space<vmem>>, vector<32x32xbf16>,
      %144 = tpu.iota {dimensions = array<i32: 0>} : vector<16x32xi32>
      %c0_69 = arith.constant 0 : index
      %c0_70 = arith.constant 0 : index
      %145 = vector.load %arg3[%c0_69, %c0_70] : memref<1x32xi32, #tpu.memory_space<vmem>>, vector<1x32xi32>
      %146 = vector.broadcast %145 : vector<1x32xi32> to vector<16x32xi32>
      %147 = arith.cmpi eq, %144, %146 : vector<16x32xi32>
      %148 = arith.extui %147 : vector<16x32xi1> to vector<16x32xi32>
      %149 = arith.sitofp %148 : vector<16x32xi32> to vector<16x32xf32>
      %150 = arith.truncf %149 : vector<16x32xf32> to vector<16x32xbf16>
      %c0_71 = arith.constant 0 : index
      %c0_72 = arith.constant 0 : index
      %151 = vector.load %arg18[%c0_71, %c0_72] : memref<16x32xbf16, #tpu.memory_space<vmem>>, vector<16x32xbf16>
      tpu.vector_store %arg18[%c0_71, %c0_72], %150 {strides = array<i32>} : memref<16x32xbf16, #tpu.memory_space<vmem>>, vector<16x32xbf16>,
      %c0_i32_73 = arith.constant 0 : i32
      %152 = tpu.memref_slice %arg19[%c0_i32_73] : memref<2x!tpu.dma_semaphore, #tpu.memory_space<semaphore_mem>> -> memref<1x!tpu.dma_semaphore, #tpu.memory_space<semaphore_mem>>
      %153 = tpu.memref_squeeze %152 : memref<1x!tpu.dma_semaphore, #tpu.memory_space<semaphore_mem>> -> memref<!tpu.dma_semaphore, #tpu.memory_space<semaphore_mem>>
      tpu.wait_dma2 semaphore(%153 : memref<!tpu.dma_semaphore, #tpu.memory_space<semaphore_mem>>) src(%arg4 : memref<16x128xf32, #tpu.memory_space<any>>) dst(%arg15 : memref<16x128xf32, #tpu.memory_space<vmem>>)
      %c1_i32_74 = arith.constant 1 : i32
      %154 = tpu.memref_slice %arg19[%c1_i32_74] : memref<2x!tpu.dma_semaphore, #tpu.memory_space<semaphore_mem>> -> memref<1x!tpu.dma_semaphore, #tpu.memory_space<semaphore_mem>>
      %155 = tpu.memref_squeeze %154 : memref<1x!tpu.dma_semaphore, #tpu.memory_space<semaphore_mem>> -> memref<!tpu.dma_semaphore, #tpu.memory_space<semaphore_mem>>
      tpu.wait_dma2 semaphore(%155 : memref<!tpu.dma_semaphore, #tpu.memory_space<semaphore_mem>>) src(%arg5 : memref<32x128xf32, #tpu.memory_space<any>>) dst(%arg16 : memref<32x128xf32, #tpu.memory_space<vmem>>)
    } else {
    }
    %c0 = arith.constant 0 : index
    %c0_1 = arith.constant 0 : index
    %3 = vector.load %arg15[%c0, %c0_1] : memref<16x128xf32, #tpu.memory_space<vmem>>, vector<16x128xf32>
    %c0_2 = arith.constant 0 : index
    %c0_3 = arith.constant 0 : index
    %4 = vector.load %arg16[%c0_2, %c0_3] : memref<32x128xf32, #tpu.memory_space<vmem>>, vector<32x128xf32>
    %5 = arith.truncf %3 : vector<16x128xf32> to vector<16x128xbf16>
    %6 = arith.truncf %4 : vector<32x128xf32> to vector<32x128xbf16>
    %c0_4 = arith.constant 0 : index
    %c0_5 = arith.constant 0 : index
    %c0_6 = arith.constant 0 : index
    %7 = vector.load %arg14[%c0_4, %c0_5, %c0_6] : memref<1x16x128xf32, #tpu.memory_space<vmem>>, vector<1x16x128xf32>
    %8 = vector.shape_cast %7 : vector<1x16x128xf32> to vector<16x128xf32>
    %9 = vector.extract_strided_slice %8 {offsets = [0, 0], sizes = [1, 128], strides = [1, 1]} : vector<16x128xf32> to vector<1x128xf32>
    %10 = vector.extract_strided_slice %8 {offsets = [1, 0], sizes = [1, 128], strides = [1, 1]} : vector<16x128xf32> to vector<1x128xf32>
    %11 = vector.extract_strided_slice %8 {offsets = [2, 0], sizes = [1, 128], strides = [1, 1]} : vector<16x128xf32> to vector<1x128xf32>
    %12 = vector.extract_strided_slice %8 {offsets = [3, 0], sizes = [1, 128], strides = [1, 1]} : vector<16x128xf32> to vector<1x128xf32>
    %13 = vector.extract_strided_slice %8 {offsets = [4, 0], sizes = [1, 128], strides = [1, 1]} : vector<16x128xf32> to vector<1x128xf32>
    %14 = vector.extract_strided_slice %8 {offsets = [5, 0], sizes = [1, 128], strides = [1, 1]} : vector<16x128xf32> to vector<1x128xf32>
    %15 = vector.extract_strided_slice %8 {offsets = [6, 0], sizes = [1, 128], strides = [1, 1]} : vector<16x128xf32> to vector<1x128xf32>
    %16 = vector.extract_strided_slice %8 {offsets = [7, 0], sizes = [1, 128], strides = [1, 1]} : vector<16x128xf32> to vector<1x128xf32>
    %17 = vector.extract_strided_slice %8 {offsets = [8, 0], sizes = [1, 128], strides = [1, 1]} : vector<16x128xf32> to vector<1x128xf32>
    %18 = vector.extract_strided_slice %8 {offsets = [9, 0], sizes = [1, 128], strides = [1, 1]} : vector<16x128xf32> to vector<1x128xf32>
    %c0_7 = arith.constant 0 : index
    %c0_8 = arith.constant 0 : index
    %c0_9 = arith.constant 0 : index
    %19 = vector.load %arg6[%c0_7, %c0_8, %c0_9] : memref<1x128x256xbf16, #tpu.memory_space<vmem>>, vector<1x128x256xbf16>
    %20 = vector.shape_cast %19 : vector<1x128x256xbf16> to vector<128x256xbf16>
    %cst = arith.constant dense<0.000000e+00> : vector<16x256xf32>
    %21 = tpu.matmul %5, %20, %cst {dimension_numbers = #tpu.dot_dimension_numbers<[1], [0], [0], [1], [0, 0, 1, 1], [], []>} : vector<16x128xbf16>, vector<128x256xbf16>, vector<16x256xf32> -> vector<16x256xf32>
    %22 = vector.extract_strided_slice %21 {offsets = [0, 0], sizes = [16, 128], strides = [1, 1]} : vector<16x256xf32> to vector<16x128xf32>
    %23 = vector.extract_strided_slice %21 {offsets = [0, 128], sizes = [16, 128], strides = [1, 1]} : vector<16x256xf32> to vector<16x128xf32>
    %24 = tpu.concatenate %22, %23 in 0 : vector<16x128xf32>, vector<16x128xf32> -> vector<32x128xf32>
    %25 = arith.truncf %24 : vector<32x128xf32> to vector<32x128xbf16>
    %c0_10 = arith.constant 0 : index
    %c0_11 = arith.constant 0 : index
    %26 = vector.load %arg17[%c0_10, %c0_11] : memref<32x32xbf16, #tpu.memory_space<vmem>>, vector<32x32xbf16>
    %cst_12 = arith.constant dense<0.000000e+00> : vector<32x128xf32>
    %27 = tpu.matmul %26, %25, %cst_12 {dimension_numbers = #tpu.dot_dimension_numbers<[1], [0], [0], [1], [0, 0, 1, 1], [], []>} : vector<32x32xbf16>, vector<32x128xbf16>, vector<32x128xf32> -> vector<32x128xf32>
    %c0_13 = arith.constant 0 : index
    %c0_14 = arith.constant 0 : index
    %c0_15 = arith.constant 0 : index
    %28 = vector.load %arg7[%c0_13, %c0_14, %c0_15] : memref<1x128x128xbf16, #tpu.memory_space<vmem>>, vector<1x128x128xbf16>
    %29 = vector.shape_cast %28 : vector<1x128x128xbf16> to vector<128x128xbf16>
    %cst_16 = arith.constant dense<0.000000e+00> : vector<32x128xf32>
    %30 = tpu.matmul %6, %29, %cst_16 {dimension_numbers = #tpu.dot_dimension_numbers<[1], [0], [0], [1], [0, 0, 1, 1], [], []>} : vector<32x128xbf16>, vector<128x128xbf16>, vector<32x128xf32> -> vector<32x128xf32>
    %31 = arith.addf %27, %30 : vector<32x128xf32>
    %32 = vector.broadcast %9 : vector<1x128xf32> to vector<32x128xf32>
    %33 = arith.addf %31, %32 : vector<32x128xf32>
    %cst_17 = arith.constant 0.000000e+00 : f32
    %34 = vector.broadcast %cst_17 : f32 to vector<32x128xf32>
    %35 = arith.maximumf %33, %34 : vector<32x128xf32>
    %36 = arith.truncf %35 : vector<32x128xf32> to vector<32x128xbf16>
    %c0_18 = arith.constant 0 : index
    %c0_19 = arith.constant 0 : index
    %c0_20 = arith.constant 0 : index
    %37 = vector.load %arg8[%c0_18, %c0_19, %c0_20] : memref<1x128x128xbf16, #tpu.memory_space<vmem>>, vector<1x128x128xbf16>
    %38 = vector.shape_cast %37 : vector<1x128x128xbf16> to vector<128x128xbf16>
    %cst_21 = arith.constant dense<0.000000e+00> : vector<32x128xf32>
    %39 = tpu.matmul %36, %38, %cst_21 {dimension_numbers = #tpu.dot_dimension_numbers<[1], [0], [0], [1], [0, 0, 1, 1], [], []>} : vector<32x128xbf16>, vector<128x128xbf16>, vector<32x128xf32> -> vector<32x128xf32>
    %40 = vector.broadcast %10 : vector<1x128xf32> to vector<32x128xf32>
    %41 = arith.addf %39, %40 : vector<32x128xf32>
    %cst_22 = arith.constant 0.000000e+00 : f32
    %42 = vector.broadcast %cst_22 : f32 to vector<32x128xf32>
    %43 = arith.maximumf %41, %42 : vector<32x128xf32>
    %44 = arith.truncf %43 : vector<32x128xf32> to vector<32x128xbf16>
    %c0_23 = arith.constant 0 : index
    %c0_24 = arith.constant 0 : index
    %c0_25 = arith.constant 0 : index
    %45 = vector.load %arg9[%c0_23, %c0_24, %c0_25] : memref<1x128x128xbf16, #tpu.memory_space<vmem>>, vector<1x128x128xbf16>
    %46 = vector.shape_cast %45 : vector<1x128x128xbf16> to vector<128x128xbf16>
    %cst_26 = arith.constant dense<0.000000e+00> : vector<32x128xf32>
    %47 = tpu.matmul %44, %46, %cst_26 {dimension_numbers = #tpu.dot_dimension_numbers<[1], [0], [0], [1], [0, 0, 1, 1], [], []>} : vector<32x128xbf16>, vector<128x128xbf16>, vector<32x128xf32> -> vector<32x128xf32>
    %48 = vector.broadcast %11 : vector<1x128xf32> to vector<32x128xf32>
    %49 = arith.addf %47, %48 : vector<32x128xf32>
    %cst_27 = arith.constant dense<0.000000e+00> : vector<32xf32>
    %50 = vector.multi_reduction <add>, %49, %cst_27 [1] : vector<32x128xf32> to vector<32xf32>
    %51 = vector.shape_cast %50 : vector<32xf32> to vector<32x1xf32>
    %cst_28 = arith.constant 1.280000e+02 : f32
    %52 = vector.broadcast %cst_28 : f32 to vector<32x1xf32>
    %53 = arith.divf %51, %52 : vector<32x1xf32>
    %54 = vector.broadcast %53 : vector<32x1xf32> to vector<32x128xf32>
    %55 = arith.subf %49, %54 : vector<32x128xf32>
    %56 = arith.mulf %55, %55 : vector<32x128xf32>
    %cst_29 = arith.constant dense<0.000000e+00> : vector<32xf32>
    %57 = vector.multi_reduction <add>, %56, %cst_29 [1] : vector<32x128xf32> to vector<32xf32>
    %58 = vector.shape_cast %57 : vector<32xf32> to vector<32x1xf32>
    %cst_30 = arith.constant 1.280000e+02 : f32
    %59 = vector.broadcast %cst_30 : f32 to vector<32x1xf32>
    %60 = arith.divf %58, %59 : vector<32x1xf32>
    %61 = vector.broadcast %53 : vector<32x1xf32> to vector<32x128xf32>
    %62 = arith.subf %49, %61 : vector<32x128xf32>
    %cst_31 = arith.constant 9.99999974E-6 : f32
    %63 = vector.broadcast %cst_31 : f32 to vector<32x1xf32>
    %64 = arith.addf %60, %63 : vector<32x1xf32>
    %65 = math.rsqrt %64 : vector<32x1xf32>
    %66 = vector.broadcast %65 : vector<32x1xf32> to vector<32x128xf32>
    %67 = arith.mulf %62, %66 : vector<32x128xf32>
    %68 = vector.broadcast %12 : vector<1x128xf32> to vector<32x128xf32>
    %69 = arith.mulf %67, %68 : vector<32x128xf32>
    %70 = vector.broadcast %13 : vector<1x128xf32> to vector<32x128xf32>
    %71 = arith.addf %69, %70 : vector<32x128xf32>
    %c0_32 = arith.constant 0 : index
    %c0_33 = arith.constant 0 : index
    %72 = vector.load %arg16[%c0_32, %c0_33] : memref<32x128xf32, #tpu.memory_space<vmem>>, vector<32x128xf32>
    tpu.vector_store %arg16[%c0_32, %c0_33], %71 {strides = array<i32>} : memref<32x128xf32, #tpu.memory_space<vmem>>, vector<32x128xf32>,
    %73 = arith.truncf %71 : vector<32x128xf32> to vector<32x128xbf16>
    %c0_34 = arith.constant 0 : index
    %c0_35 = arith.constant 0 : index
    %c0_36 = arith.constant 0 : index
    %74 = vector.load %arg11[%c0_34, %c0_35, %c0_36] : memref<1x128x128xbf16, #tpu.memory_space<vmem>>, vector<1x128x128xbf16>
    %75 = vector.shape_cast %74 : vector<1x128x128xbf16> to vector<128x128xbf16>
    %cst_37 = arith.constant dense<0.000000e+00> : vector<32x128xf32>
    %76 = tpu.matmul %73, %75, %cst_37 {dimension_numbers = #tpu.dot_dimension_numbers<[1], [0], [0], [1], [0, 0, 1, 1], [], []>} : vector<32x128xbf16>, vector<128x128xbf16>, vector<32x128xf32> -> vector<32x128xf32>
    %c0_38 = arith.constant 0 : index
    %c0_39 = arith.constant 0 : index
    %77 = vector.load %arg18[%c0_38, %c0_39] : memref<16x32xbf16, #tpu.memory_space<vmem>>, vector<16x32xbf16>
    %78 = arith.truncf %76 : vector<32x128xf32> to vector<32x128xbf16>
    %cst_40 = arith.constant dense<0.000000e+00> : vector<16x128xf32>
    %79 = tpu.matmul %77, %78, %cst_40 {dimension_numbers = #tpu.dot_dimension_numbers<[1], [0], [0], [1], [0, 0, 1, 1], [], []>} : vector<16x32xbf16>, vector<32x128xbf16>, vector<16x128xf32> -> vector<16x128xf32>
    %c0_41 = arith.constant 0 : index
    %c0_42 = arith.constant 0 : index
    %c0_43 = arith.constant 0 : index
    %80 = vector.load %arg10[%c0_41, %c0_42, %c0_43] : memref<1x128x128xbf16, #tpu.memory_space<vmem>>, vector<1x128x128xbf16>
    %81 = vector.shape_cast %80 : vector<1x128x128xbf16> to vector<128x128xbf16>
    %cst_44 = arith.constant dense<0.000000e+00> : vector<16x128xf32>
    %82 = tpu.matmul %5, %81, %cst_44 {dimension_numbers = #tpu.dot_dimension_numbers<[1], [0], [0], [1], [0, 0, 1, 1], [], []>} : vector<16x128xbf16>, vector<128x128xbf16>, vector<16x128xf32> -> vector<16x128xf32>
    %83 = arith.addf %82, %79 : vector<16x128xf32>
    %84 = vector.broadcast %14 : vector<1x128xf32> to vector<16x128xf32>
    %85 = arith.addf %83, %84 : vector<16x128xf32>
    %cst_45 = arith.constant 0.000000e+00 : f32
    %86 = vector.broadcast %cst_45 : f32 to vector<16x128xf32>
    %87 = arith.maximumf %85, %86 : vector<16x128xf32>
    %88 = arith.truncf %87 : vector<16x128xf32> to vector<16x128xbf16>
    %c0_46 = arith.constant 0 : index
    %c0_47 = arith.constant 0 : index
    %c0_48 = arith.constant 0 : index
    %89 = vector.load %arg12[%c0_46, %c0_47, %c0_48] : memref<1x128x128xbf16, #tpu.memory_space<vmem>>, vector<1x128x128xbf16>
    %90 = vector.shape_cast %89 : vector<1x128x128xbf16> to vector<128x128xbf16>
    %cst_49 = arith.constant dense<0.000000e+00> : vector<16x128xf32>
    %91 = tpu.matmul %88, %90, %cst_49 {dimension_numbers = #tpu.dot_dimension_numbers<[1], [0], [0], [1], [0, 0, 1, 1], [], []>} : vector<16x128xbf16>, vector<128x128xbf16>, vector<16x128xf32> -> vector<16x128xf32>
    %92 = vector.broadcast %15 : vector<1x128xf32> to vector<16x128xf32>
    %93 = arith.addf %91, %92 : vector<16x128xf32>
    %cst_50 = arith.constant 0.000000e+00 : f32
    %94 = vector.broadcast %cst_50 : f32 to vector<16x128xf32>
    %95 = arith.maximumf %93, %94 : vector<16x128xf32>
    %96 = arith.truncf %95 : vector<16x128xf32> to vector<16x128xbf16>
    %c0_51 = arith.constant 0 : index
    %c0_52 = arith.constant 0 : index
    %c0_53 = arith.constant 0 : index
    %97 = vector.load %arg13[%c0_51, %c0_52, %c0_53] : memref<1x128x128xbf16, #tpu.memory_space<vmem>>, vector<1x128x128xbf16>
    %98 = vector.shape_cast %97 : vector<1x128x128xbf16> to vector<128x128xbf16>
    %cst_54 = arith.constant dense<0.000000e+00> : vector<16x128xf32>
    %99 = tpu.matmul %96, %98, %cst_54 {dimension_numbers = #tpu.dot_dimension_numbers<[1], [0], [0], [1], [0, 0, 1, 1], [], []>} : vector<16x128xbf16>, vector<128x128xbf16>, vector<16x128xf32> -> vector<16x128xf32>
    %100 = vector.broadcast %16 : vector<1x128xf32> to vector<16x128xf32>
    %101 = arith.addf %99, %100 : vector<16x128xf32>
    %cst_55 = arith.constant dense<0.000000e+00> : vector<16xf32>
    %102 = vector.multi_reduction <add>, %101, %cst_55 [1] : vector<16x128xf32> to vector<16xf32>
    %103 = vector.shape_cast %102 : vector<16xf32> to vector<16x1xf32>
    %cst_56 = arith.constant 1.280000e+02 : f32
    %104 = vector.broadcast %cst_56 : f32 to vector<16x1xf32>
    %105 = arith.divf %103, %104 : vector<16x1xf32>
    %106 = vector.broadcast %105 : vector<16x1xf32> to vector<16x128xf32>
    %107 = arith.subf %101, %106 : vector<16x128xf32>
    %108 = arith.mulf %107, %107 : vector<16x128xf32>
    %cst_57 = arith.constant dense<0.000000e+00> : vector<16xf32>
    %109 = vector.multi_reduction <add>, %108, %cst_57 [1] : vector<16x128xf32> to vector<16xf32>
    %110 = vector.shape_cast %109 : vector<16xf32> to vector<16x1xf32>
    %cst_58 = arith.constant 1.280000e+02 : f32
    %111 = vector.broadcast %cst_58 : f32 to vector<16x1xf32>
    %112 = arith.divf %110, %111 : vector<16x1xf32>
    %113 = vector.broadcast %105 : vector<16x1xf32> to vector<16x128xf32>
    %114 = arith.subf %101, %113 : vector<16x128xf32>
    %cst_59 = arith.constant 9.99999974E-6 : f32
    %115 = vector.broadcast %cst_59 : f32 to vector<16x1xf32>
    %116 = arith.addf %112, %115 : vector<16x1xf32>
    %117 = math.rsqrt %116 : vector<16x1xf32>
    %118 = vector.broadcast %117 : vector<16x1xf32> to vector<16x128xf32>
    %119 = arith.mulf %114, %118 : vector<16x128xf32>
    %120 = vector.broadcast %17 : vector<1x128xf32> to vector<16x128xf32>
    %121 = arith.mulf %119, %120 : vector<16x128xf32>
    %122 = vector.broadcast %18 : vector<1x128xf32> to vector<16x128xf32>
    %123 = arith.addf %121, %122 : vector<16x128xf32>
    %124 = arith.addf %123, %3 : vector<16x128xf32>
    %c0_60 = arith.constant 0 : index
    %c0_61 = arith.constant 0 : index
    %125 = vector.load %arg15[%c0_60, %c0_61] : memref<16x128xf32, #tpu.memory_space<vmem>>, vector<16x128xf32>
    tpu.vector_store %arg15[%c0_60, %c0_61], %124 {strides = array<i32>} : memref<16x128xf32, #tpu.memory_space<vmem>>, vector<16x128xf32>,
    return
  }
  func.func @transform_0(%arg0: i32) -> (i32, i32) {
    %c0_i32 = arith.constant 0 : i32
    %c0_i32_0 = arith.constant 0 : i32
    %c0_i32_1 = arith.constant 0 : i32
    return %c0_i32, %c0_i32_0 : i32, i32
  }
  func.func @transform_1(%arg0: i32) -> (i32, i32) {
    %c0_i32 = arith.constant 0 : i32
    %c0_i32_0 = arith.constant 0 : i32
    %c0_i32_1 = arith.constant 0 : i32
    return %c0_i32, %c0_i32_0 : i32, i32
  }
  func.func @transform_2(%arg0: i32) -> (i32, i32) {
    %c0_i32 = arith.constant 0 : i32
    %c0_i32_0 = arith.constant 0 : i32
    %c0_i32_1 = arith.constant 0 : i32
    return %c0_i32, %c0_i32_0 : i32, i32
  }
  func.func @transform_5(%arg0: i32) -> (i32, i32, i32) {
    %c0_i32 = arith.constant 0 : i32
    %c0_i32_0 = arith.constant 0 : i32
    %c0_i32_1 = arith.constant 0 : i32
    return %arg0, %c0_i32, %c0_i32_0 : i32, i32, i32
  }
  func.func @transform_6(%arg0: i32) -> (i32, i32, i32) {
    %c0_i32 = arith.constant 0 : i32
    %c0_i32_0 = arith.constant 0 : i32
    %c0_i32_1 = arith.constant 0 : i32
    return %arg0, %c0_i32, %c0_i32_0 : i32, i32, i32
  }
  func.func @transform_7(%arg0: i32) -> (i32, i32, i32) {
    %c0_i32 = arith.constant 0 : i32
    %c0_i32_0 = arith.constant 0 : i32
    %c0_i32_1 = arith.constant 0 : i32
    return %arg0, %c0_i32, %c0_i32_0 : i32, i32, i32
  }
  func.func @transform_8(%arg0: i32) -> (i32, i32, i32) {
    %c0_i32 = arith.constant 0 : i32
    %c0_i32_0 = arith.constant 0 : i32
    %c0_i32_1 = arith.constant 0 : i32
    return %arg0, %c0_i32, %c0_i32_0 : i32, i32, i32
  }
  func.func @transform_9(%arg0: i32) -> (i32, i32, i32) {
    %c0_i32 = arith.constant 0 : i32
    %c0_i32_0 = arith.constant 0 : i32
    %c0_i32_1 = arith.constant 0 : i32
    return %arg0, %c0_i32, %c0_i32_0 : i32, i32, i32
  }
  func.func @transform_10(%arg0: i32) -> (i32, i32, i32) {
    %c0_i32 = arith.constant 0 : i32
    %c0_i32_0 = arith.constant 0 : i32
    %c0_i32_1 = arith.constant 0 : i32
    return %arg0, %c0_i32, %c0_i32_0 : i32, i32, i32
  }
  func.func @transform_11(%arg0: i32) -> (i32, i32, i32) {
    %c0_i32 = arith.constant 0 : i32
    %c0_i32_0 = arith.constant 0 : i32
    %c0_i32_1 = arith.constant 0 : i32
    return %arg0, %c0_i32, %c0_i32_0 : i32, i32, i32
  }
  func.func @transform_12(%arg0: i32) -> (i32, i32, i32) {
    %c0_i32 = arith.constant 0 : i32
    %c0_i32_0 = arith.constant 0 : i32
    %c0_i32_1 = arith.constant 0 : i32
    return %arg0, %c0_i32, %c0_i32_0 : i32, i32, i32
  }
  func.func @transform_13(%arg0: i32) -> (i32, i32, i32) {
    %c0_i32 = arith.constant 0 : i32
    %c0_i32_0 = arith.constant 0 : i32
    %c0_i32_1 = arith.constant 0 : i32
    return %arg0, %c0_i32, %c0_i32_0 : i32, i32, i32
  }
  func.func @transform_14(%arg0: i32) -> (i32, i32) {
    %c0_i32 = arith.constant 0 : i32
    %c0_i32_0 = arith.constant 0 : i32
    %c0_i32_1 = arith.constant 0 : i32
    return %c0_i32, %c0_i32_0 : i32, i32
  }
  func.func @transform_15(%arg0: i32) -> (i32, i32) {
    %c0_i32 = arith.constant 0 : i32
    %c0_i32_0 = arith.constant 0 : i32
    %c0_i32_1 = arith.constant 0 : i32
    return %c0_i32, %c0_i32_0 : i32, i32
  }
}

</mosaic_0001>

<llo_original>
// kernel: processor_forward.1
$region0: #{processor_forward.1}
  #allocation0 [shape = 'u32[]', space=smem, size = 0x4, offset = 0x4, fixed_abs, tag = 'smem constant byte address 0x4 - core index']
  #allocation1 [shape = 'u32[144,128]{1,0:T(1,128)}', space=vmem, size = 0x12000, scoped, tag = 'internal scratch']
  #allocation2 [shape = 'bf16[32,32]{1,0:T(16,128)(2,1)}', space=vmem, size = 0x2000, scoped, tag = 'scratch operand']
  #allocation3 [shape = 'bf16[16,32]{1,0:T(16,128)(2,1)}', space=vmem, size = 0x1000, scoped, tag = 'scratch operand']
  #allocation4 [shape = 's32[2]{0}', space=sflag, size = 0x8, scoped, tag = 'scratch operand']
  #allocation22 [shape = 's32[]', space=sflag, size = 0x4, offset = 0, fixed_abs, tag = 'sflag constant byte address 0x0 - dummy sync flag']
  #allocation23 [shape = 's32[]', space=sflag, size = 0x4, offset = 0, fixed_abs, tag = 'sflag constant byte address 0x0 - dummy sync flag']
  %s0 = inlined_call_operand.vmem [shape: s32[32,1], index: 0, kind: input, shape index: {}]
  %s1 = inlined_call_operand.vmem [shape: s32[32,1], index: 1, kind: input, shape index: {}]
  %s2 = inlined_call_operand.vmem [shape: s32[1,32], index: 2, kind: input, shape index: {}]
  %s3 = inlined_call_operand.vmem [shape: f32[16,128], index: 3, kind: input, shape index: {}]
  %s4 = inlined_call_operand.vmem [shape: f32[32,128], index: 4, kind: input, shape index: {}]
  %s5 = inlined_call_operand.hbm [shape: bf16[2,128,256], index: 5, kind: input, shape index: {}]
  %s6 = inlined_call_operand.hbm [shape: bf16[2,128,128], index: 6, kind: input, shape index: {}]
  %s7 = inlined_call_operand.hbm [shape: bf16[2,128,128], index: 7, kind: input, shape index: {}]
  %s8 = inlined_call_operand.hbm [shape: bf16[2,128,128], index: 8, kind: input, shape index: {}]
  %s9 = inlined_call_operand.hbm [shape: bf16[2,128,128], index: 9, kind: input, shape index: {}]
  %s10 = inlined_call_operand.hbm [shape: bf16[2,128,128], index: 10, kind: input, shape index: {}]
  %s11 = inlined_call_operand.hbm [shape: bf16[2,128,128], index: 11, kind: input, shape index: {}]
  %s12 = inlined_call_operand.hbm [shape: bf16[2,128,128], index: 12, kind: input, shape index: {}]
  %s13 = inlined_call_operand.vmem [shape: f32[2,16,128], index: 13, kind: input, shape index: {}]
  %s14 = inlined_call_operand.hbm [shape: f32[16,128], index: 14, kind: output, shape index: {0}]
  %s15 = inlined_call_operand.hbm [shape: f32[32,128], index: 15, kind: output, shape index: {1}]
  %16 = xla_tuple %s14, %s15
  %s17 = sld [smem:[#allocation0]]
  $region193: #{processor_forward.1} parent=0
    _
  %s19 = ssub.s32 1, %s17
  %s20 = scalar_select 0, %s19, %s17
  $region1: #{processor_forward.1} parent=0
    #allocation5 [shape = 'u8[131072]{0}', space=vmem, size = 0x20000, scoped, tag = 'input window, operand 5']
    #allocation6 [shape = 's32[2]{0}', space=sflag, size = 0x8, scoped, tag = 'scoped memory for processor_forward.1']
    #allocation7 [shape = 's32[2]{0}', space=sflag, size = 0x8, scoped, tag = 'scoped memory for processor_forward.1']
    #allocation8 [shape = 'u8[65536]{0}', space=vmem, size = 0x10000, scoped, tag = 'input window, operand 6']
    #allocation9 [shape = 's32[2]{0}', space=sflag, size = 0x8, scoped, tag = 'scoped memory for processor_forward.1']
    #allocation10 [shape = 'u8[65536]{0}', space=vmem, size = 0x10000, scoped, tag = 'input window, operand 7']
    #allocation11 [shape = 'u8[65536]{0}', space=vmem, size = 0x10000, scoped, tag = 'input window, operand 8']
    #allocation12 [shape = 's32[2]{0}', space=sflag, size = 0x8, scoped, tag = 'scoped memory for processor_forward.1']
    #allocation13 [shape = 'u8[65536]{0}', space=vmem, size = 0x10000, scoped, tag = 'input window, operand 9']
    #allocation14 [shape = 'u8[65536]{0}', space=vmem, size = 0x10000, scoped, tag = 'input window, operand 10']
    #allocation15 [shape = 's32[2]{0}', space=sflag, size = 0x8, scoped, tag = 'scoped memory for processor_forward.1']
    #allocation16 [shape = 'u8[65536]{0}', space=vmem, size = 0x10000, scoped, tag = 'input window, operand 11']
    #allocation17 [shape = 'u8[65536]{0}', space=vmem, size = 0x10000, scoped, tag = 'input window, operand 12']
    #allocation18 [shape = 's32[2]{0}', space=sflag, size = 0x8, scoped, tag = 'scoped memory for processor_forward.1']
    #allocation19 [shape = 'u8[8192]{0}', space=vmem, size = 0x2000, scoped, tag = 'output window, operand 0, single buffered']
    #allocation20 [shape = 'u8[16384]{0}', space=vmem, size = 0x4000, scoped, tag = 'output window, operand 1, single buffered']
    #allocation21 [shape = 's32[1]{0}', space=sflag, size = 0x4, scoped, tag = 'scoped memory for processor_forward.1']
    %21 = vsyncpa [#allocation6], 0
    %s22 = scalar_lea.sflag [#allocation6], 1
    %23 = vsyncpa %s22, 0
    %24 = vsyncpa [#allocation9], 0
    %s25 = scalar_lea.sflag [#allocation9], 1
    %26 = vsyncpa %s25, 0
    %27 = vsyncpa [#allocation12], 0
    %s28 = scalar_lea.sflag [#allocation12], 1
    %29 = vsyncpa %s28, 0
    %30 = vsyncpa [#allocation15], 0
    %s31 = scalar_lea.sflag [#allocation15], 1
    %32 = vsyncpa %s31, 0
    %33 = vsyncpa [#allocation18], 0
    %s34 = scalar_lea.sflag [#allocation18], 1
    %35 = vsyncpa %s34, 0
    %36 = vsyncpa [#allocation7], 0
    %37 = vsyncpa [#allocation21], 0
    loop: start=0, step=1, limit=4
    $region2: #{processor_forward.1} parent=1 // loop_pre_header
      _
    $region3: #{processor_forward.1} parent=1 // loop_header
      %s39 = sphi 0, %s43
      %p40 = scmp.ge.s32.totalorder %s39, 4
      %s47 = sphi 0, %s47
      %s49 = sphi 0, %s47
      %s50 = sphi 0, %s49
      %s64 = sphi 0, %s50
      %s68 = sphi 0, %s68
      %s70 = sphi 0, %s68
      %s71 = sphi 0, %s70
      %s85 = sphi 0, %s71
      %s89 = sphi 0, %s89
      %s91 = sphi 0, %s89
      %s92 = sphi 0, %s91
      %s106 = sphi 0, %s92
      %s112 = sphi 0, %s114
      %s115 = sphi 0, %s112
      %s116 = sphi 0, %s115
      %s132 = sphi 0, %s116
      %s138 = sphi 0, %s140
      %s141 = sphi 0, %s138
      %s142 = sphi 0, %s141
      %s158 = sphi 0, %s142
      %s164 = sphi 0, %s166
      %s167 = sphi 0, %s164
      %s168 = sphi 0, %s167
      %s184 = sphi 0, %s168
      %s190 = sphi 0, %s192
      %s193 = sphi 0, %s190
      %s194 = sphi 0, %s193
      %s210 = sphi 0, %s194
      %s216 = sphi 0, %s218
      %s219 = sphi 0, %s216
      %s220 = sphi 0, %s219
      %s236 = sphi 0, %s220
      %s242 = sphi 0, %s244
      %s245 = sphi 0, %s242
      %s246 = sphi 0, %s245
      %s262 = sphi 0, %s246
      %s268 = sphi 0, %s270
      %s271 = sphi 0, %s268
      %s272 = sphi 0, %s271
      %s288 = sphi 0, %s272
      %s294 = sphi 0, %s296
      %s297 = sphi 0, %s294
      %s298 = sphi 0, %s297
      %s314 = sphi 0, %s298
      %s320 = sphi 0, %s322
      %s323 = sphi 0, %s320
      %s324 = sphi 0, %s323
      %s340 = sphi 0, %s324
      %s344 = sphi 0, %s344
      %s346 = sphi 0, %s344
      %s347 = sphi 0, %s346
      %s361 = sphi 0, %s347
      %s365 = sphi 0, %s365
      %s367 = sphi 0, %s365
      %s368 = sphi 0, %s367
      %s382 = sphi 0, %s368
    $region4: #{processor_forward.1} parent=1 // loop_header_branch
      %42 = sbr.rel (%p40) target = $region8
    $region5: #{processor_forward.1} parent=1 // loop_body
      %s44 = ssub.s32 %s39, 1
      %s45 = ssub.s32 %s39, 2
      %s46 = sadd.s32 %s39, 1
      %s48 = sadd.s32 %s47, 1
      %p51 = scmp.eq.s32.totalorder %s39, 1
      %p52 = scmp.ne.s32.totalorder %s47, %s49
      %p53 = scmp.eq.s32.totalorder %s39, 0
      %p54 = por %p52, %p53
      %p55 = scmp.ne.s32.totalorder %s47, %s49
      %p56 = scmp.eq.s32.totalorder %s44, 1
      %p57 = por %p55, %p56
      %p58 = scmp.ne.s32.totalorder %s49, %s50
      %p59 = scmp.eq.s32.totalorder %s44, 0
      %p60 = por %p58, %p59
      %p61 = scmp.ne.s32.totalorder %s49, %s50
      %p62 = scmp.eq.s32.totalorder %s45, 1
      %p63 = por %p61, %p62
      %p65 = scmp.ne.s32.totalorder %s50, %s64
      %p66 = scmp.eq.s32.totalorder %s45, 0
      %p67 = por %p65, %p66
      %s69 = sadd.s32 %s68, 1
      %p72 = scmp.eq.s32.totalorder %s39, 1
      %p73 = scmp.ne.s32.totalorder %s68, %s70
      %p74 = scmp.eq.s32.totalorder %s39, 0
      %p75 = por %p73, %p74
      %p76 = scmp.ne.s32.totalorder %s68, %s70
      %p77 = scmp.eq.s32.totalorder %s44, 1
      %p78 = por %p76, %p77
      %p79 = scmp.ne.s32.totalorder %s70, %s71
      %p80 = scmp.eq.s32.totalorder %s44, 0
      %p81 = por %p79, %p80
      %p82 = scmp.ne.s32.totalorder %s70, %s71
      %p83 = scmp.eq.s32.totalorder %s45, 1
      %p84 = por %p82, %p83
      %p86 = scmp.ne.s32.totalorder %s71, %s85
      %p87 = scmp.eq.s32.totalorder %s45, 0
      %p88 = por %p86, %p87
      %s90 = sadd.s32 %s89, 1
      %p93 = scmp.eq.s32.totalorder %s39, 1
      %p94 = scmp.ne.s32.totalorder %s89, %s91
      %p95 = scmp.eq.s32.totalorder %s39, 0
      %p96 = por %p94, %p95
      %p97 = scmp.ne.s32.totalorder %s89, %s91
      %p98 = scmp.eq.s32.totalorder %s44, 1
      %p99 = por %p97, %p98
      %p100 = scmp.ne.s32.totalorder %s91, %s92
      %p101 = scmp.eq.s32.totalorder %s44, 0
      %p102 = por %p100, %p101
      %p103 = scmp.ne.s32.totalorder %s91, %s92
      %p104 = scmp.eq.s32.totalorder %s45, 1
      %p105 = por %p103, %p104
      %p107 = scmp.ne.s32.totalorder %s92, %s106
      %p108 = scmp.eq.s32.totalorder %s45, 0
      %p109 = por %p107, %p108
      %s110 = ssub.s32 %s39, %s46
      %p111 = scmp.eq.s32.totalorder %s110, 0
      %s113 = sadd.s32 %s112, 1
      %s114 = scalar_select %p111, %s112, %s113
      %p117 = pneg %p111
      %p118 = scmp.eq.s32.totalorder %s39, 1
      %p119 = por %p117, %p118
      %p120 = scmp.ne.s32.totalorder %s112, %s115
      %p121 = scmp.eq.s32.totalorder %s39, 0
      %p122 = por %p120, %p121
      %p123 = scmp.ne.s32.totalorder %s112, %s115
      %p124 = scmp.eq.s32.totalorder %s44, 1
      %p125 = por %p123, %p124
      %p126 = scmp.ne.s32.totalorder %s115, %s116
      %p127 = scmp.eq.s32.totalorder %s44, 0
      %p128 = por %p126, %p127
      %p129 = scmp.ne.s32.totalorder %s115, %s116
      %p130 = scmp.eq.s32.totalorder %s45, 1
      %p131 = por %p129, %p130
      %p133 = scmp.ne.s32.totalorder %s116, %s132
      %p134 = scmp.eq.s32.totalorder %s45, 0
      %p135 = por %p133, %p134
      %s136 = ssub.s32 %s39, %s46
      %p137 = scmp.eq.s32.totalorder %s136, 0
      %s139 = sadd.s32 %s138, 1
      %s140 = scalar_select %p137, %s138, %s139
      %p143 = pneg %p137
      %p144 = scmp.eq.s32.totalorder %s39, 1
      %p145 = por %p143, %p144
      %p146 = scmp.ne.s32.totalorder %s138, %s141
      %p147 = scmp.eq.s32.totalorder %s39, 0
      %p148 = por %p146, %p147
      %p149 = scmp.ne.s32.totalorder %s138, %s141
      %p150 = scmp.eq.s32.totalorder %s44, 1
      %p151 = por %p149, %p150
      %p152 = scmp.ne.s32.totalorder %s141, %s142
      %p153 = scmp.eq.s32.totalorder %s44, 0
      %p154 = por %p152, %p153
      %p155 = scmp.ne.s32.totalorder %s141, %s142
      %p156 = scmp.eq.s32.totalorder %s45, 1
      %p157 = por %p155, %p156
      %p159 = scmp.ne.s32.totalorder %s142, %s158
      %p160 = scmp.eq.s32.totalorder %s45, 0
      %p161 = por %p159, %p160
      %s162 = ssub.s32 %s39, %s46
      %p163 = scmp.eq.s32.totalorder %s162, 0
      %s165 = sadd.s32 %s164, 1
      %s166 = scalar_select %p163, %s164, %s165
      %p169 = pneg %p163
      %p170 = scmp.eq.s32.totalorder %s39, 1
      %p171 = por %p169, %p170
      %p172 = scmp.ne.s32.totalorder %s164, %s167
      %p173 = scmp.eq.s32.totalorder %s39, 0
      %p174 = por %p172, %p173
      %p175 = scmp.ne.s32.totalorder %s164, %s167
      %p176 = scmp.eq.s32.totalorder %s44, 1
      %p177 = por %p175, %p176
      %p178 = scmp.ne.s32.totalorder %s167, %s168
      %p179 = scmp.eq.s32.totalorder %s44, 0
      %p180 = por %p178, %p179
      %p181 = scmp.ne.s32.totalorder %s167, %s168
      %p182 = scmp.eq.s32.totalorder %s45, 1
      %p183 = por %p181, %p182
      %p185 = scmp.ne.s32.totalorder %s168, %s184
      %p186 = scmp.eq.s32.totalorder %s45, 0
      %p187 = por %p185, %p186
      %s188 = ssub.s32 %s39, %s46
      %p189 = scmp.eq.s32.totalorder %s188, 0
      %s191 = sadd.s32 %s190, 1
      %s192 = scalar_select %p189, %s190, %s191
      %p195 = pneg %p189
      %p196 = scmp.eq.s32.totalorder %s39, 1
      %p197 = por %p195, %p196
      %p198 = scmp.ne.s32.totalorder %s190, %s193
      %p199 = scmp.eq.s32.totalorder %s39, 0
      %p200 = por %p198, %p199
      %p201 = scmp.ne.s32.totalorder %s190, %s193
      %p202 = scmp.eq.s32.totalorder %s44, 1
      %p203 = por %p201, %p202
      %p204 = scmp.ne.s32.totalorder %s193, %s194
      %p205 = scmp.eq.s32.totalorder %s44, 0
      %p206 = por %p204, %p205
      %p207 = scmp.ne.s32.totalorder %s193, %s194
      %p208 = scmp.eq.s32.totalorder %s45, 1
      %p209 = por %p207, %p208
      %p211 = scmp.ne.s32.totalorder %s194, %s210
      %p212 = scmp.eq.s32.totalorder %s45, 0
      %p213 = por %p211, %p212
      %s214 = ssub.s32 %s39, %s46
      %p215 = scmp.eq.s32.totalorder %s214, 0
      %s217 = sadd.s32 %s216, 1
      %s218 = scalar_select %p215, %s216, %s217
      %p221 = pneg %p215
      %p222 = scmp.eq.s32.totalorder %s39, 1
      %p223 = por %p221, %p222
      %p224 = scmp.ne.s32.totalorder %s216, %s219
      %p225 = scmp.eq.s32.totalorder %s39, 0
      %p226 = por %p224, %p225
      %p227 = scmp.ne.s32.totalorder %s216, %s219
      %p228 = scmp.eq.s32.totalorder %s44, 1
      %p229 = por %p227, %p228
      %p230 = scmp.ne.s32.totalorder %s219, %s220
      %p231 = scmp.eq.s32.totalorder %s44, 0
      %p232 = por %p230, %p231
      %p233 = scmp.ne.s32.totalorder %s219, %s220
      %p234 = scmp.eq.s32.totalorder %s45, 1
      %p235 = por %p233, %p234
      %p237 = scmp.ne.s32.totalorder %s220, %s236
      %p238 = scmp.eq.s32.totalorder %s45, 0
      %p239 = por %p237, %p238
      %s240 = ssub.s32 %s39, %s46
      %p241 = scmp.eq.s32.totalorder %s240, 0
      %s243 = sadd.s32 %s242, 1
      %s244 = scalar_select %p241, %s242, %s243
      %p247 = pneg %p241
      %p248 = scmp.eq.s32.totalorder %s39, 1
      %p249 = por %p247, %p248
      %p250 = scmp.ne.s32.totalorder %s242, %s245
      %p251 = scmp.eq.s32.totalorder %s39, 0
      %p252 = por %p250, %p251
      %p253 = scmp.ne.s32.totalorder %s242, %s245
      %p254 = scmp.eq.s32.totalorder %s44, 1
      %p255 = por %p253, %p254
      %p256 = scmp.ne.s32.totalorder %s245, %s246
      %p257 = scmp.eq.s32.totalorder %s44, 0
      %p258 = por %p256, %p257
      %p259 = scmp.ne.s32.totalorder %s245, %s246
      %p260 = scmp.eq.s32.totalorder %s45, 1
      %p261 = por %p259, %p260
      %p263 = scmp.ne.s32.totalorder %s246, %s262
      %p264 = scmp.eq.s32.totalorder %s45, 0
      %p265 = por %p263, %p264
      %s266 = ssub.s32 %s39, %s46
      %p267 = scmp.eq.s32.totalorder %s266, 0
      %s269 = sadd.s32 %s268, 1
      %s270 = scalar_select %p267, %s268, %s269
      %p273 = pneg %p267
      %p274 = scmp.eq.s32.totalorder %s39, 1
      %p275 = por %p273, %p274
      %p276 = scmp.ne.s32.totalorder %s268, %s271
      %p277 = scmp.eq.s32.totalorder %s39, 0
      %p278 = por %p276, %p277
      %p279 = scmp.ne.s32.totalorder %s268, %s271
      %p280 = scmp.eq.s32.totalorder %s44, 1
      %p281 = por %p279, %p280
      %p282 = scmp.ne.s32.totalorder %s271, %s272
      %p283 = scmp.eq.s32.totalorder %s44, 0
      %p284 = por %p282, %p283
      %p285 = scmp.ne.s32.totalorder %s271, %s272
      %p286 = scmp.eq.s32.totalorder %s45, 1
      %p287 = por %p285, %p286
      %p289 = scmp.ne.s32.totalorder %s272, %s288
      %p290 = scmp.eq.s32.totalorder %s45, 0
      %p291 = por %p289, %p290
      %s292 = ssub.s32 %s39, %s46
      %p293 = scmp.eq.s32.totalorder %s292, 0
      %s295 = sadd.s32 %s294, 1
      %s296 = scalar_select %p293, %s294, %s295
      %p299 = pneg %p293
      %p300 = scmp.eq.s32.totalorder %s39, 1
      %p301 = por %p299, %p300
      %p302 = scmp.ne.s32.totalorder %s294, %s297
      %p303 = scmp.eq.s32.totalorder %s39, 0
      %p304 = por %p302, %p303
      %p305 = scmp.ne.s32.totalorder %s294, %s297
      %p306 = scmp.eq.s32.totalorder %s44, 1
      %p307 = por %p305, %p306
      %p308 = scmp.ne.s32.totalorder %s297, %s298
      %p309 = scmp.eq.s32.totalorder %s44, 0
      %p310 = por %p308, %p309
      %p311 = scmp.ne.s32.totalorder %s297, %s298
      %p312 = scmp.eq.s32.totalorder %s45, 1
      %p313 = por %p311, %p312
      %p315 = scmp.ne.s32.totalorder %s298, %s314
      %p316 = scmp.eq.s32.totalorder %s45, 0
      %p317 = por %p315, %p316
      %s318 = ssub.s32 %s39, %s46
      %p319 = scmp.eq.s32.totalorder %s318, 0
      %s321 = sadd.s32 %s320, 1
      %s322 = scalar_select %p319, %s320, %s321
      %p325 = pneg %p319
      %p326 = scmp.eq.s32.totalorder %s39, 1
      %p327 = por %p325, %p326
      %p328 = scmp.ne.s32.totalorder %s320, %s323
      %p329 = scmp.eq.s32.totalorder %s39, 0
      %p330 = por %p328, %p329
      %p331 = scmp.ne.s32.totalorder %s320, %s323
      %p332 = scmp.eq.s32.totalorder %s44, 1
      %p333 = por %p331, %p332
      %p334 = scmp.ne.s32.totalorder %s323, %s324
      %p335 = scmp.eq.s32.totalorder %s44, 0
      %p336 = por %p334, %p335
      %p337 = scmp.ne.s32.totalorder %s323, %s324
      %p338 = scmp.eq.s32.totalorder %s45, 1
      %p339 = por %p337, %p338
      %p341 = scmp.ne.s32.totalorder %s324, %s340
      %p342 = scmp.eq.s32.totalorder %s45, 0
      %p343 = por %p341, %p342
      %s345 = sadd.s32 %s344, 1
      %p348 = scmp.eq.s32.totalorder %s39, 1
      %p349 = scmp.ne.s32.totalorder %s344, %s346
      %p350 = scmp.eq.s32.totalorder %s39, 0
      %p351 = por %p349, %p350
      %p352 = scmp.ne.s32.totalorder %s344, %s346
      %p353 = scmp.eq.s32.totalorder %s44, 1
      %p354 = por %p352, %p353
      %p355 = scmp.ne.s32.totalorder %s346, %s347
      %p356 = scmp.eq.s32.totalorder %s44, 0
      %p357 = por %p355, %p356
      %p358 = scmp.ne.s32.totalorder %s346, %s347
      %p359 = scmp.eq.s32.totalorder %s45, 1
      %p360 = por %p358, %p359
      %p362 = scmp.ne.s32.totalorder %s347, %s361
      %p363 = scmp.eq.s32.totalorder %s45, 0
      %p364 = por %p362, %p363
      %s366 = sadd.s32 %s365, 1
      %p369 = scmp.eq.s32.totalorder %s39, 1
      %p370 = scmp.ne.s32.totalorder %s365, %s367
      %p371 = scmp.eq.s32.totalorder %s39, 0
      %p372 = por %p370, %p371
      %p373 = scmp.ne.s32.totalorder %s365, %s367
      %p374 = scmp.eq.s32.totalorder %s44, 1
      %p375 = por %p373, %p374
      %p376 = scmp.ne.s32.totalorder %s367, %s368
      %p377 = scmp.eq.s32.totalorder %s44, 0
      %p378 = por %p376, %p377
      %p379 = scmp.ne.s32.totalorder %s367, %s368
      %p380 = scmp.eq.s32.totalorder %s45, 1
      %p381 = por %p379, %p380
      %p383 = scmp.ne.s32.totalorder %s368, %s382
      %p384 = scmp.eq.s32.totalorder %s45, 0
      %p385 = por %p383, %p384
      %p386 = scmp.le.s32.totalorder 1, %s39
      %p387 = scmp.lt.s32.totalorder %s39, 3
      %p388 = pnand %p386, %p387
      %p389 = pneg %p388
      // Predicated region
      $region9: #{processor_forward.1} parent=5 // pred_check
        _
      $region10: #{processor_forward.1} parent=5 // pred_check_branch
        %391 = sbr.rel (%p388) target = $region12
      $region11: #{processor_forward.1} parent=5 // pred_region
        %s392 = ssub.s32 %s39, 1
        // Predicated region
        $region13: #{processor_forward.1} parent=11 // pred_check
          %p393 = pneg %p60
        $region14: #{processor_forward.1} parent=11 // pred_check_branch
          %395 = sbr.rel (%p393) target = $region16
        $region15: #{processor_forward.1} parent=11 // pred_region
          _
        $region16: #{processor_forward.1} parent=11 // pred_fallthru
          _
        // Predicated region
        $region17: #{processor_forward.1} parent=11 // pred_check
          %p396 = pneg %p81
        $region18: #{processor_forward.1} parent=11 // pred_check_branch
          %398 = sbr.rel (%p396) target = $region20
        $region19: #{processor_forward.1} parent=11 // pred_region
          _
        $region20: #{processor_forward.1} parent=11 // pred_fallthru
          _
        // Predicated region
        $region21: #{processor_forward.1} parent=11 // pred_check
          %p399 = pneg %p102
        $region22: #{processor_forward.1} parent=11 // pred_check_branch
          %401 = sbr.rel (%p399) target = $region24
        $region23: #{processor_forward.1} parent=11 // pred_region
          _
        $region24: #{processor_forward.1} parent=11 // pred_fallthru
          _
      $region12: #{processor_forward.1} parent=5 // pred_fallthru
        _
      %p402 = scmp.lt.s32.totalorder %s39, 2
      // Predicated region
      $region25: #{processor_forward.1} parent=5 // pred_check
        %p403 = pneg %p402
      $region26: #{processor_forward.1} parent=5 // pred_check_branch
        %405 = sbr.rel (%p403) target = $region28
      $region27: #{processor_forward.1} parent=5 // pred_region
        // Predicated region
        $region29: #{processor_forward.1} parent=27 // pred_check
          %p406 = pneg %p122
        $region30: #{processor_forward.1} parent=27 // pred_check_branch
          %408 = sbr.rel (%p406) target = $region32
        $region31: #{processor_forward.1} parent=27 // pred_region
          %s409 = sand.u32 %s112, 1
          %s410 = scalar_lea.sflag [#allocation6], %s409
          %s411 = sand.u32 %s112, 1
          %s412 = smul.addr %s411, 128
          %s413 = scalar_lea.vmem [#allocation5], %s412
          %s415 = ssub.s32 2048, 2048
          %416 = vsyncadd %s410, %s415
          %s417 = smul.addr %s39, 32
          %s418 = smul.addr %s417, 64
          %s419 = scalar_lea.hbm %s5, %s418
          %s420 = sshll.u32 %s413, 4
          %s421 = int_to_ptr.vmem [resolvable:$true] %s420
          %426 = dma.hbm_to_vmem [thread:$0]  %s419, 2048, %s421, %s410, 128, 128, 8
        $region32: #{processor_forward.1} parent=27 // pred_fallthru
          _
        // Predicated region
        $region33: #{processor_forward.1} parent=27 // pred_check
          %p427 = pneg %p148
        $region34: #{processor_forward.1} parent=27 // pred_check_branch
          %429 = sbr.rel (%p427) target = $region36
        $region35: #{processor_forward.1} parent=27 // pred_region
          %s430 = sand.u32 %s39, 1
          %s431 = scalar_lea.sflag [#allocation9], %s430
          %s432 = sand.u32 %s138, 1
          %s433 = smul.addr %s432, 64
          %s434 = scalar_lea.vmem [#allocation8], %s433
          %s436 = ssub.s32 1024, 1024
          %437 = vsyncadd %s431, %s436
          %s438 = smul.addr %s39, 16
          %s439 = smul.addr %s438, 64
          %s440 = scalar_lea.hbm %s6, %s439
          %s441 = sshll.u32 %s434, 4
          %s442 = int_to_ptr.vmem [resolvable:$true] %s441
          %447 = dma.hbm_to_vmem [thread:$0]  %s440, 1024, %s442, %s431, 64, 64, 4
        $region36: #{processor_forward.1} parent=27 // pred_fallthru
          _
        // Predicated region
        $region37: #{processor_forward.1} parent=27 // pred_check
          %p448 = pneg %p174
        $region38: #{processor_forward.1} parent=27 // pred_check_branch
          %450 = sbr.rel (%p448) target = $region40
        $region39: #{processor_forward.1} parent=27 // pred_region
          %s451 = sand.u32 %s39, 1
          %s452 = scalar_lea.sflag [#allocation9], %s451
          %s453 = sand.u32 %s164, 1
          %s454 = smul.addr %s453, 64
          %s455 = scalar_lea.vmem [#allocation10], %s454
          %s457 = ssub.s32 1024, 1024
          %458 = vsyncadd %s452, %s457
          %s459 = smul.addr %s39, 16
          %s460 = smul.addr %s459, 64
          %s461 = scalar_lea.hbm %s7, %s460
          %s462 = sshll.u32 %s455, 4
          %s463 = int_to_ptr.vmem [resolvable:$true] %s462
          %468 = dma.hbm_to_vmem [thread:$0]  %s461, 1024, %s463, %s452, 64, 64, 4
        $region40: #{processor_forward.1} parent=27 // pred_fallthru
          _
        // Predicated region
        $region41: #{processor_forward.1} parent=27 // pred_check
          %p469 = pneg %p200
        $region42: #{processor_forward.1} parent=27 // pred_check_branch
          %471 = sbr.rel (%p469) target = $region44
        $region43: #{processor_forward.1} parent=27 // pred_region
          %s472 = sand.u32 %s39, 1
          %s473 = scalar_lea.sflag [#allocation12], %s472
          %s474 = sand.u32 %s190, 1
          %s475 = smul.addr %s474, 64
          %s476 = scalar_lea.vmem [#allocation11], %s475
          %s478 = ssub.s32 1024, 1024
          %479 = vsyncadd %s473, %s478
          %s480 = smul.addr %s39, 16
          %s481 = smul.addr %s480, 64
          %s482 = scalar_lea.hbm %s8, %s481
          %s483 = sshll.u32 %s476, 4
          %s484 = int_to_ptr.vmem [resolvable:$true] %s483
          %489 = dma.hbm_to_vmem [thread:$0]  %s482, 1024, %s484, %s473, 64, 64, 4
        $region44: #{processor_forward.1} parent=27 // pred_fallthru
          _
        // Predicated region
        $region45: #{processor_forward.1} parent=27 // pred_check
          %p490 = pneg %p226
        $region46: #{processor_forward.1} parent=27 // pred_check_branch
          %492 = sbr.rel (%p490) target = $region48
        $region47: #{processor_forward.1} parent=27 // pred_region
          %s493 = sand.u32 %s39, 1
          %s494 = scalar_lea.sflag [#allocation12], %s493
          %s495 = sand.u32 %s216, 1
          %s496 = smul.addr %s495, 64
          %s497 = scalar_lea.vmem [#allocation13], %s496
          %s499 = ssub.s32 1024, 1024
          %500 = vsyncadd %s494, %s499
          %s501 = smul.addr %s39, 16
          %s502 = smul.addr %s501, 64
          %s503 = scalar_lea.hbm %s9, %s502
          %s504 = sshll.u32 %s497, 4
          %s505 = int_to_ptr.vmem [resolvable:$true] %s504
          %510 = dma.hbm_to_vmem [thread:$0]  %s503, 1024, %s505, %s494, 64, 64, 4
        $region48: #{processor_forward.1} parent=27 // pred_fallthru
          _
        // Predicated region
        $region49: #{processor_forward.1} parent=27 // pred_check
          %p511 = pneg %p252
        $region50: #{processor_forward.1} parent=27 // pred_check_branch
          %513 = sbr.rel (%p511) target = $region52
        $region51: #{processor_forward.1} parent=27 // pred_region
          %s514 = sand.u32 %s39, 1
          %s515 = scalar_lea.sflag [#allocation15], %s514
          %s516 = sand.u32 %s242, 1
          %s517 = smul.addr %s516, 64
          %s518 = scalar_lea.vmem [#allocation14], %s517
          %s520 = ssub.s32 1024, 1024
          %521 = vsyncadd %s515, %s520
          %s522 = smul.addr %s39, 16
          %s523 = smul.addr %s522, 64
          %s524 = scalar_lea.hbm %s10, %s523
          %s525 = sshll.u32 %s518, 4
          %s526 = int_to_ptr.vmem [resolvable:$true] %s525
          %531 = dma.hbm_to_vmem [thread:$0]  %s524, 1024, %s526, %s515, 64, 64, 4
        $region52: #{processor_forward.1} parent=27 // pred_fallthru
          _
        // Predicated region
        $region53: #{processor_forward.1} parent=27 // pred_check
          %p532 = pneg %p278
        $region54: #{processor_forward.1} parent=27 // pred_check_branch
          %534 = sbr.rel (%p532) target = $region56
        $region55: #{processor_forward.1} parent=27 // pred_region
          %s535 = sand.u32 %s39, 1
          %s536 = scalar_lea.sflag [#allocation15], %s535
          %s537 = sand.u32 %s268, 1
          %s538 = smul.addr %s537, 64
          %s539 = scalar_lea.vmem [#allocation16], %s538
          %s541 = ssub.s32 1024, 1024
          %542 = vsyncadd %s536, %s541
          %s543 = smul.addr %s39, 16
          %s544 = smul.addr %s543, 64
          %s545 = scalar_lea.hbm %s11, %s544
          %s546 = sshll.u32 %s539, 4
          %s547 = int_to_ptr.vmem [resolvable:$true] %s546
          %552 = dma.hbm_to_vmem [thread:$0]  %s545, 1024, %s547, %s536, 64, 64, 4
        $region56: #{processor_forward.1} parent=27 // pred_fallthru
          _
        // Predicated region
        $region57: #{processor_forward.1} parent=27 // pred_check
          %p553 = pneg %p304
        $region58: #{processor_forward.1} parent=27 // pred_check_branch
          %555 = sbr.rel (%p553) target = $region60
        $region59: #{processor_forward.1} parent=27 // pred_region
          %s556 = sand.u32 %s294, 1
          %s557 = scalar_lea.sflag [#allocation18], %s556
          %s558 = sand.u32 %s294, 1
          %s559 = smul.addr %s558, 64
          %s560 = scalar_lea.vmem [#allocation17], %s559
          %s562 = ssub.s32 1024, 1024
          %563 = vsyncadd %s557, %s562
          %s564 = smul.addr %s39, 16
          %s565 = smul.addr %s564, 64
          %s566 = scalar_lea.hbm %s12, %s565
          %s567 = sshll.u32 %s560, 4
          %s568 = int_to_ptr.vmem [resolvable:$true] %s567
          %573 = dma.hbm_to_vmem [thread:$0]  %s566, 1024, %s568, %s557, 64, 64, 4
        $region60: #{processor_forward.1} parent=27 // pred_fallthru
          _
        // Predicated region
        $region61: #{processor_forward.1} parent=27 // pred_check
          %p574 = pneg %p330
        $region62: #{processor_forward.1} parent=27 // pred_check_branch
          %576 = sbr.rel (%p574) target = $region64
        $region63: #{processor_forward.1} parent=27 // pred_region
          %p577 = scmp.lt.s32.totalorder %s39, 1
          %s578 = scalar_select %p577, %s39, 1
          %s579 = smul.addr %s578, 2
          %s580 = smul.addr %s579, 8
          %s581 = scalar_lea.vmem %s13, %s580
        $region64: #{processor_forward.1} parent=27 // pred_fallthru
          _
      $region28: #{processor_forward.1} parent=5 // pred_fallthru
        _
      %p582 = scmp.le.s32.totalorder 1, %s39
      %p583 = scmp.lt.s32.totalorder %s39, 3
      %p584 = pnand %p582, %p583
      %p585 = pneg %p584
      // Predicated region
      $region65: #{processor_forward.1} parent=5 // pred_check
        _
      $region66: #{processor_forward.1} parent=5 // pred_check_branch
        %587 = sbr.rel (%p584) target = $region68
      $region67: #{processor_forward.1} parent=5 // pred_region
        %s588 = ssub.s32 %s39, 1
        %s589 = sand.u32 %s115, 1
        %s590 = scalar_lea.sflag [#allocation6], %s589
        %s591 = sand.u32 %s115, 1
        %s592 = smul.addr %s591, 128
        %s593 = scalar_lea.vmem [#allocation5], %s592
        // Predicated region
        $region69: #{processor_forward.1} parent=67 // pred_check
          %p594 = pneg %p128
        $region70: #{processor_forward.1} parent=67 // pred_check_branch
          %596 = sbr.rel (%p594) target = $region72
        $region71: #{processor_forward.1} parent=67 // pred_region
          %597 = dma.done %s590, 2048
        $region72: #{processor_forward.1} parent=67 // pred_fallthru
          _
        %s598 = sand.u32 %s44, 1
        %s599 = scalar_lea.sflag [#allocation9], %s598
        %s600 = sand.u32 %s141, 1
        %s601 = smul.addr %s600, 64
        %s602 = scalar_lea.vmem [#allocation8], %s601
        // Predicated region
        $region73: #{processor_forward.1} parent=67 // pred_check
          %p603 = pneg %p154
        $region74: #{processor_forward.1} parent=67 // pred_check_branch
          %605 = sbr.rel (%p603) target = $region76
        $region75: #{processor_forward.1} parent=67 // pred_region
          %606 = dma.done %s599, 1024
        $region76: #{processor_forward.1} parent=67 // pred_fallthru
          _
        %s607 = sand.u32 %s44, 1
        %s608 = scalar_lea.sflag [#allocation9], %s607
        %s609 = sand.u32 %s167, 1
        %s610 = smul.addr %s609, 64
        %s611 = scalar_lea.vmem [#allocation10], %s610
        // Predicated region
        $region77: #{processor_forward.1} parent=67 // pred_check
          %p612 = pneg %p180
        $region78: #{processor_forward.1} parent=67 // pred_check_branch
          %614 = sbr.rel (%p612) target = $region80
        $region79: #{processor_forward.1} parent=67 // pred_region
          %615 = dma.done %s608, 1024
        $region80: #{processor_forward.1} parent=67 // pred_fallthru
          _
        %s616 = sand.u32 %s44, 1
        %s617 = scalar_lea.sflag [#allocation12], %s616
        %s618 = sand.u32 %s193, 1
        %s619 = smul.addr %s618, 64
        %s620 = scalar_lea.vmem [#allocation11], %s619
        // Predicated region
        $region81: #{processor_forward.1} parent=67 // pred_check
          %p621 = pneg %p206
        $region82: #{processor_forward.1} parent=67 // pred_check_branch
          %623 = sbr.rel (%p621) target = $region84
        $region83: #{processor_forward.1} parent=67 // pred_region
          %624 = dma.done %s617, 1024
        $region84: #{processor_forward.1} parent=67 // pred_fallthru
          _
        %s625 = sand.u32 %s44, 1
        %s626 = scalar_lea.sflag [#allocation12], %s625
        %s627 = sand.u32 %s219, 1
        %s628 = smul.addr %s627, 64
        %s629 = scalar_lea.vmem [#allocation13], %s628
        // Predicated region
        $region85: #{processor_forward.1} parent=67 // pred_check
          %p630 = pneg %p232
        $region86: #{processor_forward.1} parent=67 // pred_check_branch
          %632 = sbr.rel (%p630) target = $region88
        $region87: #{processor_forward.1} parent=67 // pred_region
          %633 = dma.done %s626, 1024
        $region88: #{processor_forward.1} parent=67 // pred_fallthru
          _
        %s634 = sand.u32 %s44, 1
        %s635 = scalar_lea.sflag [#allocation15], %s634
        %s636 = sand.u32 %s245, 1
        %s637 = smul.addr %s636, 64
        %s638 = scalar_lea.vmem [#allocation14], %s637
        // Predicated region
        $region89: #{processor_forward.1} parent=67 // pred_check
          %p639 = pneg %p258
        $region90: #{processor_forward.1} parent=67 // pred_check_branch
          %641 = sbr.rel (%p639) target = $region92
        $region91: #{processor_forward.1} parent=67 // pred_region
          %642 = dma.done %s635, 1024
        $region92: #{processor_forward.1} parent=67 // pred_fallthru
          _
        %s643 = sand.u32 %s44, 1
        %s644 = scalar_lea.sflag [#allocation15], %s643
        %s645 = sand.u32 %s271, 1
        %s646 = smul.addr %s645, 64
        %s647 = scalar_lea.vmem [#allocation16], %s646
        // Predicated region
        $region93: #{processor_forward.1} parent=67 // pred_check
          %p648 = pneg %p284
        $region94: #{processor_forward.1} parent=67 // pred_check_branch
          %650 = sbr.rel (%p648) target = $region96
        $region95: #{processor_forward.1} parent=67 // pred_region
          %651 = dma.done %s644, 1024
        $region96: #{processor_forward.1} parent=67 // pred_fallthru
          _
        %s652 = sand.u32 %s297, 1
        %s653 = scalar_lea.sflag [#allocation18], %s652
        %s654 = sand.u32 %s297, 1
        %s655 = smul.addr %s654, 64
        %s656 = scalar_lea.vmem [#allocation17], %s655
        // Predicated region
        $region97: #{processor_forward.1} parent=67 // pred_check
          %p657 = pneg %p310
        $region98: #{processor_forward.1} parent=67 // pred_check_branch
          %659 = sbr.rel (%p657) target = $region100
        $region99: #{processor_forward.1} parent=67 // pred_region
          %660 = dma.done %s653, 1024
        $region100: #{processor_forward.1} parent=67 // pred_fallthru
          _
        %p661 = pneg %p60
        %p662 = pneg %p57
        %p663 = pneg %p81
        %p664 = pneg %p78
        %p665 = pneg %p102
        %p666 = pneg %p99
        %s667 = sand.u32 %s115, 1
        %s668 = scalar_lea.sflag [#allocation6], %s667
        %s669 = sand.u32 %s115, 1
        %s670 = smul.addr %s669, 128
        %s671 = scalar_lea.vmem [#allocation5], %s670
        %p672 = pneg %p128
        %p673 = pneg %p125
        %s674 = sand.u32 %s44, 1
        %s675 = scalar_lea.sflag [#allocation9], %s674
        %s676 = sand.u32 %s141, 1
        %s677 = smul.addr %s676, 64
        %s678 = scalar_lea.vmem [#allocation8], %s677
        %p679 = pneg %p154
        %p680 = pneg %p151
        %s681 = sand.u32 %s44, 1
        %s682 = scalar_lea.sflag [#allocation9], %s681
        %s683 = sand.u32 %s167, 1
        %s684 = smul.addr %s683, 64
        %s685 = scalar_lea.vmem [#allocation10], %s684
        %p686 = pneg %p180
        %p687 = pneg %p177
        %s688 = sand.u32 %s44, 1
        %s689 = scalar_lea.sflag [#allocation12], %s688
        %s690 = sand.u32 %s193, 1
        %s691 = smul.addr %s690, 64
        %s692 = scalar_lea.vmem [#allocation11], %s691
        %p693 = pneg %p206
        %p694 = pneg %p203
        %s695 = sand.u32 %s44, 1
        %s696 = scalar_lea.sflag [#allocation12], %s695
        %s697 = sand.u32 %s219, 1
        %s698 = smul.addr %s697, 64
        %s699 = scalar_lea.vmem [#allocation13], %s698
        %p700 = pneg %p232
        %p701 = pneg %p229
        %s702 = sand.u32 %s44, 1
        %s703 = scalar_lea.sflag [#allocation15], %s702
        %s704 = sand.u32 %s245, 1
        %s705 = smul.addr %s704, 64
        %s706 = scalar_lea.vmem [#allocation14], %s705
        %p707 = pneg %p258
        %p708 = pneg %p255
        %s709 = sand.u32 %s44, 1
        %s710 = scalar_lea.sflag [#allocation15], %s709
        %s711 = sand.u32 %s271, 1
        %s712 = smul.addr %s711, 64
        %s713 = scalar_lea.vmem [#allocation16], %s712
        %p714 = pneg %p284
        %p715 = pneg %p281
        %s716 = sand.u32 %s297, 1
        %s717 = scalar_lea.sflag [#allocation18], %s716
        %s718 = sand.u32 %s297, 1
        %s719 = smul.addr %s718, 64
        %s720 = scalar_lea.vmem [#allocation17], %s719
        %p721 = pneg %p310
        %p722 = pneg %p307
        %p723 = scmp.lt.s32.totalorder %s44, 1
        %s724 = scalar_select %p723, %s44, 1
        %s725 = smul.addr %s724, 2
        %s726 = smul.addr %s725, 8
        %s727 = scalar_lea.vmem %s13, %s726
        %p728 = pneg %p336
        %p729 = pneg %p333
        %p730 = pneg %p357
        %p731 = pneg %p354
        %p732 = pneg %p378
        %p733 = pneg %p375
        %p734 = scmp.lt.s32.totalorder %s44, 1
        %s735 = scalar_select %p734, %s44, 1
        %s736 = smul.addr %s735, 2
        %s737 = smul.addr %s736, 8
        %s738 = scalar_lea.vmem %s13, %s737
        %p740 = scmp.eq.s32.totalorder %s44, 0
        // Predicated region
        $region101: #{processor_forward.1} parent=67 // pred_check
          %p741 = pneg %p740
        $region102: #{processor_forward.1} parent=67 // pred_check_branch
          %743 = sbr.rel (%p741) target = $region104
        $region103: #{processor_forward.1} parent=67 // pred_region
          %p745 = scmp.lt.u32.totalorder 16, 8
          %p746 = pneg %p745
          // Predicated region
          $region105: #{processor_forward.1} parent=103 // pred_check
            _
          $region106: #{processor_forward.1} parent=103 // pred_check_branch
            %748 = sbr.rel (%p745) target = $region108
          $region107: #{processor_forward.1} parent=103 // pred_region
            %s763 = sand.u32 16, 7
            %p764 = scmp.eq.s32.totalorder %s763, 0
            // Predicated region
            $region120: #{processor_forward.1} parent=107 // pred_check
              %p765 = pneg %p764
            $region121: #{processor_forward.1} parent=107 // pred_check_branch
              %767 = sbr.rel (%p765) target = $region123
            $region122: #{processor_forward.1} parent=107 // pred_region
              loop: start=0, step=1, limit=1
              $region124: #{processor_forward.1} parent=122 // loop_pre_header
                _
              $region125: #{processor_forward.1} parent=122 // loop_header
                %s769 = sphi 0, %s773
                %p770 = scmp.ge.s32.totalorder %s769, 1
                %s774 = sphi %s3, %s3
                %s775 = sphi [#allocation19], [#allocation19]
              $region126: #{processor_forward.1} parent=122 // loop_header_branch
                %772 = sbr.rel (%p770) target = $region130
              $region127: #{processor_forward.1} parent=122 // loop_body
                %v776 = vld [vmem:[%s774] sm:$0xff]
                %777 = vst [vmem:[%s775] sm:$0xff] %v776
                %v778 = vld [vmem:[%s774 + $0x8] sm:$0xff]
                %779 = vst [vmem:[%s775 + $0x8] sm:$0xff] %v778
              $region128: #{processor_forward.1} parent=122 // loop_footer
                %s773 = sadd.s32 1, %s769
              $region129: #{processor_forward.1} parent=122 // loop_footer_branch
                %768 = sbr.rel target = $region125
              $region130: #{processor_forward.1} parent=122 // loop_exit
                _
            $region123: #{processor_forward.1} parent=107 // pred_fallthru
              _
            %p780 = pneg %p764
            // Predicated region
            $region131: #{processor_forward.1} parent=107 // pred_check
              _
            $region132: #{processor_forward.1} parent=107 // pred_check_branch
              %782 = sbr.rel (%p764) target = $region134
            $region133: #{processor_forward.1} parent=107 // pred_region
              %s783 = sand.u32 16, 7
            $region134: #{processor_forward.1} parent=107 // pred_fallthru
              _
          $region108: #{processor_forward.1} parent=103 // pred_fallthru
            _
          // Predicated region
          $region109: #{processor_forward.1} parent=103 // pred_check
            %p749 = pneg %p745
          $region110: #{processor_forward.1} parent=103 // pred_check_branch
            %751 = sbr.rel (%p749) target = $region112
          $region111: #{processor_forward.1} parent=103 // pred_region
            %s752 = sshllo.u32 0, 16
            loop: start=0, step=1, limit=1
            $region113: #{processor_forward.1} parent=111 // loop_pre_header
              _
            $region114: #{processor_forward.1} parent=111 // loop_header
              %s754 = sphi 0, %s758
              %p755 = scmp.ge.s32.totalorder %s754, 1
              %s759 = sphi %s3, %s3
              %s760 = sphi [#allocation19], [#allocation19]
            $region115: #{processor_forward.1} parent=111 // loop_header_branch
              %757 = sbr.rel (%p755) target = $region119
            $region116: #{processor_forward.1} parent=111 // loop_body
              %v761 = vld [vmem:[%s759] sm:%s752]
              %762 = vst [vmem:[%s760] sm:%s752] %v761
            $region117: #{processor_forward.1} parent=111 // loop_footer
              %s758 = sadd.s32 1, %s754
            $region118: #{processor_forward.1} parent=111 // loop_footer_branch
              %753 = sbr.rel target = $region114
            $region119: #{processor_forward.1} parent=111 // loop_exit
              _
          $region112: #{processor_forward.1} parent=103 // pred_fallthru
            _
          // Predicated region
          $region135: #{processor_forward.1} parent=103 // pred_check
            _
          $region136: #{processor_forward.1} parent=103 // pred_check_branch
            %786 = sbr.rel (0) target = $region138
          $region137: #{processor_forward.1} parent=103 // pred_region
            %787 = vsyncadd [#allocation4], 256
          $region138: #{processor_forward.1} parent=103 // pred_fallthru
            _
          %s788 = scalar_lea.sflag [#allocation4], 1
          %p790 = scmp.lt.u32.totalorder 32, 8
          %p791 = pneg %p790
          // Predicated region
          $region139: #{processor_forward.1} parent=103 // pred_check
            _
          $region140: #{processor_forward.1} parent=103 // pred_check_branch
            %793 = sbr.rel (%p790) target = $region142
          $region141: #{processor_forward.1} parent=103 // pred_region
            %s808 = sand.u32 32, 7
            %p809 = scmp.eq.s32.totalorder %s808, 0
            // Predicated region
            $region154: #{processor_forward.1} parent=141 // pred_check
              %p810 = pneg %p809
            $region155: #{processor_forward.1} parent=141 // pred_check_branch
              %812 = sbr.rel (%p810) target = $region157
            $region156: #{processor_forward.1} parent=141 // pred_region
              loop: start=0, step=1, limit=1
              $region158: #{processor_forward.1} parent=156 // loop_pre_header
                _
              $region159: #{processor_forward.1} parent=156 // loop_header
                %s814 = sphi 0, %s818
                %p815 = scmp.ge.s32.totalorder %s814, 1
                %s819 = sphi %s4, %s4
                %s820 = sphi [#allocation20], [#allocation20]
              $region160: #{processor_forward.1} parent=156 // loop_header_branch
                %817 = sbr.rel (%p815) target = $region164
              $region161: #{processor_forward.1} parent=156 // loop_body
                %v821 = vld [vmem:[%s819] sm:$0xff]
                %822 = vst [vmem:[%s820] sm:$0xff] %v821
                %v823 = vld [vmem:[%s819 + $0x8] sm:$0xff]
                %824 = vst [vmem:[%s820 + $0x8] sm:$0xff] %v823
                %v825 = vld [vmem:[%s819 + $0x10] sm:$0xff]
                %826 = vst [vmem:[%s820 + $0x10] sm:$0xff] %v825
                %v827 = vld [vmem:[%s819 + $0x18] sm:$0xff]
                %828 = vst [vmem:[%s820 + $0x18] sm:$0xff] %v827
              $region162: #{processor_forward.1} parent=156 // loop_footer
                %s818 = sadd.s32 1, %s814
              $region163: #{processor_forward.1} parent=156 // loop_footer_branch
                %813 = sbr.rel target = $region159
              $region164: #{processor_forward.1} parent=156 // loop_exit
                _
            $region157: #{processor_forward.1} parent=141 // pred_fallthru
              _
            %p829 = pneg %p809
            // Predicated region
            $region165: #{processor_forward.1} parent=141 // pred_check
              _
            $region166: #{processor_forward.1} parent=141 // pred_check_branch
              %831 = sbr.rel (%p809) target = $region168
            $region167: #{processor_forward.1} parent=141 // pred_region
              %s832 = sand.u32 32, 7
            $region168: #{processor_forward.1} parent=141 // pred_fallthru
              _
          $region142: #{processor_forward.1} parent=103 // pred_fallthru
            _
          // Predicated region
          $region143: #{processor_forward.1} parent=103 // pred_check
            %p794 = pneg %p790
          $region144: #{processor_forward.1} parent=103 // pred_check_branch
            %796 = sbr.rel (%p794) target = $region146
          $region145: #{processor_forward.1} parent=103 // pred_region
            %s797 = sshllo.u32 0, 32
            loop: start=0, step=1, limit=1
            $region147: #{processor_forward.1} parent=145 // loop_pre_header
              _
            $region148: #{processor_forward.1} parent=145 // loop_header
              %s799 = sphi 0, %s803
              %p800 = scmp.ge.s32.totalorder %s799, 1
              %s804 = sphi %s4, %s4
              %s805 = sphi [#allocation20], [#allocation20]
            $region149: #{processor_forward.1} parent=145 // loop_header_branch
              %802 = sbr.rel (%p800) target = $region153
            $region150: #{processor_forward.1} parent=145 // loop_body
              %v806 = vld [vmem:[%s804] sm:%s797]
              %807 = vst [vmem:[%s805] sm:%s797] %v806
            $region151: #{processor_forward.1} parent=145 // loop_footer
              %s803 = sadd.s32 1, %s799
            $region152: #{processor_forward.1} parent=145 // loop_footer_branch
              %798 = sbr.rel target = $region148
            $region153: #{processor_forward.1} parent=145 // loop_exit
              _
          $region146: #{processor_forward.1} parent=103 // pred_fallthru
            _
          // Predicated region
          $region169: #{processor_forward.1} parent=103 // pred_check
            _
          $region170: #{processor_forward.1} parent=103 // pred_check_branch
            %835 = sbr.rel (0) target = $region172
          $region171: #{processor_forward.1} parent=103 // pred_region
            %836 = vsyncadd %s788, 512
          $region172: #{processor_forward.1} parent=103 // pred_fallthru
            _
          %v837 = vlaneseq
          %v838 = vand.u32 %v837, 127
          %v839 = vld [vmem:[%s0] sm:$0xff]
          %v840 = vld [vmem:[%s0 + $0x8] sm:$0xff]
          %v841 = vld [vmem:[%s0 + $0x10] sm:$0xff]
          %v842 = vld [vmem:[%s0 + $0x18] sm:$0xff]
          %843 = vset.pattern.permute.xlu0 0
          %844 = vperm.xlu0 %843, %v839
          %v845 = vpop.permute.xlu0 %844
          %846 = vset.pattern.permute.xlu0 0
          %847 = vperm.xlu0 %846, %v840
          %v848 = vpop.permute.xlu0 %847
          %849 = vset.pattern.permute.xlu0 0
          %850 = vperm.xlu0 %849, %v841
          %v851 = vpop.permute.xlu0 %850
          %852 = vset.pattern.permute.xlu0 0
          %853 = vperm.xlu0 %852, %v842
          %v854 = vpop.permute.xlu0 %853
          %vm855 = vcmp.eq.s32.totalorder %v838, %v845
          %vm856 = vcmp.eq.s32.totalorder %v838, %v848
          %vm857 = vcmp.eq.s32.totalorder %v838, %v851
          %vm858 = vcmp.eq.s32.totalorder %v838, %v854
          %v859 = vld [vmem:[%s1] sm:$0xff]
          %v860 = vld [vmem:[%s1 + $0x8] sm:$0xff]
          %v861 = vld [vmem:[%s1 + $0x10] sm:$0xff]
          %v862 = vld [vmem:[%s1 + $0x18] sm:$0xff]
          %v863 = vadd.s32 %v859, 16
          %v864 = vadd.s32 %v860, 16
          %v865 = vadd.s32 %v861, 16
          %v866 = vadd.s32 %v862, 16
          %867 = vset.pattern.permute.xlu0 0
          %868 = vperm.xlu0 %867, %v863
          %v869 = vpop.permute.xlu0 %868
          %870 = vset.pattern.permute.xlu0 0
          %871 = vperm.xlu0 %870, %v864
          %v872 = vpop.permute.xlu0 %871
          %873 = vset.pattern.permute.xlu0 0
          %874 = vperm.xlu0 %873, %v865
          %v875 = vpop.permute.xlu0 %874
          %876 = vset.pattern.permute.xlu0 0
          %877 = vperm.xlu0 %876, %v866
          %v878 = vpop.permute.xlu0 %877
          %vm879 = vcmp.eq.s32.totalorder %v838, %v869
          %vm880 = vcmp.eq.s32.totalorder %v838, %v872
          %vm881 = vcmp.eq.s32.totalorder %v838, %v875
          %vm882 = vcmp.eq.s32.totalorder %v838, %v878
          %vm883 = vmor %vm855, %vm879
          %vm884 = vmor %vm856, %vm880
          %vm885 = vmor %vm857, %vm881
          %vm886 = vmor %vm858, %vm882
          %v887 = vsel %vm883, 1, 0
          %v888 = vsel %vm884, 1, 0
          %v889 = vsel %vm885, 1, 0
          %v890 = vsel %vm886, 1, 0
          %v891 = vcvt.s32.f32 %v887
          %v892 = vcvt.s32.f32 %v888
          %v893 = vcvt.s32.f32 %v889
          %v894 = vcvt.s32.f32 %v890
          %v895 = vpack.c.bf16 %v892, %v891
          %v896 = vpack.c.bf16 %v894, %v893
          %vm897 = vcmask 261120
          %898 = vst.msk [vmem:[#allocation2] sm:$0xff] %vm897, %v895
          %899 = vst.msk [vmem:[#allocation2 + $0x8] sm:$0xff] %vm897, %v896
          %v900 = vlaneseq
          %v901 = vshrl.u32 %v900, 7
          %v902 = vadd.s32 %v901, 8
          %v903 = vld [vmem:[%s2] sm:$0x1]
          %v904 = vlaneseq
          %v905 = vshrl.u32 %v904, 7
          %v906 = vsub.s32 0, %v905
          %v907 = vrot.slane %v903, %v906
          %vm908 = vcmp.eq.s32.totalorder %v901, %v907
          %vm909 = vcmp.eq.s32.totalorder %v902, %v907
          %v910 = vsel %vm908, 1, 0
          %v911 = vsel %vm909, 1, 0
          %v912 = vcvt.s32.f32 %v910
          %v913 = vcvt.s32.f32 %v911
          %v914 = vpack.c.bf16 %v913, %v912
          %915 = vst.msk [vmem:[#allocation3] sm:$0xff] %vm897, %v914
          %s916 = smul.u32 16, 1
          %s917 = sshll.u32 %s916, 4
          %918 = dma.done [#allocation4], %s917
          %s919 = smul.u32 32, 1
          %s920 = sshll.u32 %s919, 4
          %921 = dma.done %s788, %s920
        $region104: #{processor_forward.1} parent=67 // pred_fallthru
          _
        %v922 = vld [vmem:[#allocation19] sm:$0xff]
        %v923 = vld [vmem:[#allocation19 + $0x8] sm:$0xff]
        %v924 = vld [vmem:[#allocation20] sm:$0xff]
        %v925 = vld [vmem:[#allocation20 + $0x8] sm:$0xff]
        %v926 = vld [vmem:[#allocation20 + $0x10] sm:$0xff]
        %v927 = vld [vmem:[#allocation20 + $0x18] sm:$0xff]
        %v928 = vpack.c.bf16 %v923, %v922
        %v929 = vpack.c.bf16 %v925, %v924
        %v930 = vpack.c.bf16 %v927, %v926
        %v931 = vld [vmem:[%s738] sm:$0xff]
        %v932 = vld [vmem:[%s738 + $0x8] sm:$0xff]
        %v933 = vld [vmem:[%s593] sm:$0xff]
        %v934 = vld [vmem:[%s593 + $0x8] sm:$0xff]
        %v935 = vld [vmem:[%s593 + $0x10] sm:$0xff]
        %v936 = vld [vmem:[%s593 + $0x18] sm:$0xff]
        %v937 = vld [vmem:[%s593 + $0x20] sm:$0xff]
        %v938 = vld [vmem:[%s593 + $0x28] sm:$0xff]
        %v939 = vld [vmem:[%s593 + $0x30] sm:$0xff]
        %v940 = vld [vmem:[%s593 + $0x38] sm:$0xff]
        %v941 = vld [vmem:[%s593 + $0x40] sm:$0xff]
        %v942 = vld [vmem:[%s593 + $0x48] sm:$0xff]
        %v943 = vld [vmem:[%s593 + $0x50] sm:$0xff]
        %v944 = vld [vmem:[%s593 + $0x58] sm:$0xff]
        %v945 = vld [vmem:[%s593 + $0x60] sm:$0xff]
        %v946 = vld [vmem:[%s593 + $0x68] sm:$0xff]
        %v947 = vld [vmem:[%s593 + $0x70] sm:$0xff]
        %v948 = vld [vmem:[%s593 + $0x78] sm:$0xff]
        %v965 = vunpack.c.l.b16 %v933
        %v966 = vunpack.c.h.b16 %v933
        %v967 = vunpack.c.l.b16 %v934
        %v968 = vunpack.c.h.b16 %v934
        %v969 = vunpack.c.l.b16 %v935
        %v970 = vunpack.c.h.b16 %v935
        %v971 = vunpack.c.l.b16 %v936
        %v972 = vunpack.c.h.b16 %v936
        %v973 = vunpack.c.l.b16 %v937
        %v974 = vunpack.c.h.b16 %v937
        %v975 = vunpack.c.l.b16 %v938
        %v976 = vunpack.c.h.b16 %v938
        %v977 = vunpack.c.l.b16 %v939
        %v978 = vunpack.c.h.b16 %v939
        %v979 = vunpack.c.l.b16 %v940
        %v980 = vunpack.c.h.b16 %v940
        %v981 = vunpack.c.l.b16 %v941
        %v982 = vunpack.c.h.b16 %v941
        %v983 = vunpack.c.l.b16 %v942
        %v984 = vunpack.c.h.b16 %v942
        %v985 = vunpack.c.l.b16 %v943
        %v986 = vunpack.c.h.b16 %v943
        %v987 = vunpack.c.l.b16 %v944
        %v988 = vunpack.c.h.b16 %v944
        %v989 = vunpack.c.l.b16 %v945
        %v990 = vunpack.c.h.b16 %v945
        %v991 = vunpack.c.l.b16 %v946
        %v992 = vunpack.c.h.b16 %v946
        %v993 = vunpack.c.l.b16 %v947
        %v994 = vunpack.c.h.b16 %v947
        %v995 = vunpack.c.l.b16 %v948
        %v996 = vunpack.c.h.b16 %v948
        %v997 = vpack.c.b16 %v967, %v965
        %v998 = vpack.c.b16 %v968, %v966
        %v999 = vpack.c.b16 %v971, %v969
        %v1000 = vpack.c.b16 %v972, %v970
        %v1001 = vpack.c.b16 %v975, %v973
        %v1002 = vpack.c.b16 %v976, %v974
        %v1003 = vpack.c.b16 %v979, %v977
        %v1004 = vpack.c.b16 %v980, %v978
        %v1005 = vpack.c.b16 %v983, %v981
        %v1006 = vpack.c.b16 %v984, %v982
        %v1007 = vpack.c.b16 %v987, %v985
        %v1008 = vpack.c.b16 %v988, %v986
        %v1009 = vpack.c.b16 %v991, %v989
        %v1010 = vpack.c.b16 %v992, %v990
        %v1011 = vpack.c.b16 %v995, %v993
        %v1012 = vpack.c.b16 %v996, %v994
        %1029 = vmatprep.subr.bf16.mxu0 %v998
        %1030 = vmatpush1.bf16.msra.mxu0 %v997
        %1031 = vmatprep.subr.bf16.mxu0 %v1000
        %1032 = vmatpush1.bf16.msra.mxu0 %v999
        %1033 = vmatprep.subr.bf16.mxu0 %v1002
        %1034 = vmatpush1.bf16.msra.mxu0 %v1001
        %1035 = vmatprep.subr.bf16.mxu0 %v1004
        %1036 = vmatpush1.bf16.msra.mxu0 %v1003
        %1037 = vmatprep.subr.bf16.mxu0 %v1006
        %1038 = vmatpush1.bf16.msra.mxu0 %v1005
        %1039 = vmatprep.subr.bf16.mxu0 %v1008
        %1040 = vmatpush1.bf16.msra.mxu0 %v1007
        %1041 = vmatprep.subr.bf16.mxu0 %v1010
        %1042 = vmatpush1.bf16.msra.mxu0 %v1009
        %1043 = vmatprep.subr.bf16.mxu0 %v1012
        %1044 = vmatpush1.bf16.msra.mxu0 %v1011
        %1045 = vmatprep.subr.bf16.mxu0 0
        %1046 = vmatpush1.bf16.msra.mxu0 0
        %1047 = vmatprep.subr.bf16.mxu0 0
        %1048 = vmatpush1.bf16.msra.mxu0 0
        %1049 = vmatprep.subr.bf16.mxu0 0
        %1050 = vmatpush1.bf16.msra.mxu0 0
        %1051 = vmatprep.subr.bf16.mxu0 0
        %1052 = vmatpush1.bf16.msra.mxu0 0
        %1053 = vmatprep.subr.bf16.mxu0 0
        %1054 = vmatpush1.bf16.msra.mxu0 0
        %1055 = vmatprep.subr.bf16.mxu0 0
        %1056 = vmatpush1.bf16.msra.mxu0 0
        %1057 = vmatprep.subr.bf16.mxu0 0
        %1058 = vmatpush1.bf16.msra.mxu0 0
        %1059 = vmatprep.subr.bf16.mxu0 0
        %1060 = vmatpush1.bf16.msra.mxu0 0
        %1061 = vmatprep.mubr.bf16.mxu0 0
        %1062 = vmatmul.mubr.bf16.gmra.mrb[0].mxu0 %v928
        %v1063 = vpop.f32.mrb[0].mxu0
        %v1064 = vadd.f32 0.0, %v1063
        %v1065 = vpop.f32.mrb[0].mxu0
        %v1066 = vadd.f32 0.0, %v1065
        %v1067 = vpop.f32.mrb[0].mxu0
        %v1068 = vadd.f32 0.0, %v1067
        %v1069 = vpop.f32.mrb[0].mxu0
        %v1070 = vadd.f32 0.0, %v1069
        %1071 = vdwg.mxu0
        %v1072 = vpack.c.bf16 %v1068, %v1064
        %v1073 = vpack.c.bf16 %v1070, %v1066
        %v1074 = vld [vmem:[#allocation2] sm:$0xff]
        %v1075 = vld [vmem:[#allocation2 + $0x8] sm:$0xff]
        %v1076 = vld [vmem:[%s602] sm:$0xf]
        %v1077 = vld [vmem:[%s602 + $0x4] sm:$0xf]
        %v1078 = vld [vmem:[%s602 + $0x8] sm:$0xf]
        %v1079 = vld [vmem:[%s602 + $0xc] sm:$0xf]
        %v1080 = vld [vmem:[%s602 + $0x10] sm:$0xf]
        %v1081 = vld [vmem:[%s602 + $0x14] sm:$0xf]
        %v1082 = vld [vmem:[%s602 + $0x18] sm:$0xf]
        %v1083 = vld [vmem:[%s602 + $0x1c] sm:$0xf]
        %v1084 = vld [vmem:[%s602 + $0x20] sm:$0xf]
        %v1085 = vld [vmem:[%s602 + $0x24] sm:$0xf]
        %v1086 = vld [vmem:[%s602 + $0x28] sm:$0xf]
        %v1087 = vld [vmem:[%s602 + $0x2c] sm:$0xf]
        %v1088 = vld [vmem:[%s602 + $0x30] sm:$0xf]
        %v1089 = vld [vmem:[%s602 + $0x34] sm:$0xf]
        %v1090 = vld [vmem:[%s602 + $0x38] sm:$0xf]
        %v1091 = vld [vmem:[%s602 + $0x3c] sm:$0xf]
        %v1108 = vunpack.c.l.b16 %v1076
        %v1109 = vunpack.c.l.b16 %v1077
        %v1110 = vunpack.c.l.b16 %v1078
        %v1111 = vunpack.c.l.b16 %v1079
        %v1112 = vunpack.c.l.b16 %v1080
        %v1113 = vunpack.c.l.b16 %v1081
        %v1114 = vunpack.c.l.b16 %v1082
        %v1115 = vunpack.c.l.b16 %v1083
        %v1116 = vunpack.c.l.b16 %v1084
        %v1117 = vunpack.c.l.b16 %v1085
        %v1118 = vunpack.c.l.b16 %v1086
        %v1119 = vunpack.c.l.b16 %v1087
        %v1120 = vunpack.c.l.b16 %v1088
        %v1121 = vunpack.c.l.b16 %v1089
        %v1122 = vunpack.c.l.b16 %v1090
        %v1123 = vunpack.c.l.b16 %v1091
        %v1124 = vpack.c.b16 %v1109, %v1108
        %v1125 = vpack.c.b16 %v1111, %v1110
        %v1126 = vpack.c.b16 %v1113, %v1112
        %v1127 = vpack.c.b16 %v1115, %v1114
        %v1128 = vpack.c.b16 %v1117, %v1116
        %v1129 = vpack.c.b16 %v1119, %v1118
        %v1130 = vpack.c.b16 %v1121, %v1120
        %v1131 = vpack.c.b16 %v1123, %v1122
        %1140 = vmatprep.subr.bf16.mxu0 0
        %1141 = vmatpush1.bf16.msra.mxu0 %v1124
        %1142 = vmatprep.subr.bf16.mxu0 0
        %1143 = vmatpush1.bf16.msra.mxu0 %v1125
        %1144 = vmatprep.subr.bf16.mxu0 0
        %1145 = vmatpush1.bf16.msra.mxu0 %v1126
        %1146 = vmatprep.subr.bf16.mxu0 0
        %1147 = vmatpush1.bf16.msra.mxu0 %v1127
        %1148 = vmatprep.subr.bf16.mxu0 0
        %1149 = vmatpush1.bf16.msra.mxu0 %v1128
        %1150 = vmatprep.subr.bf16.mxu0 0
        %1151 = vmatpush1.bf16.msra.mxu0 %v1129
        %1152 = vmatprep.subr.bf16.mxu0 0
        %1153 = vmatpush1.bf16.msra.mxu0 %v1130
        %1154 = vmatprep.subr.bf16.mxu0 0
        %1155 = vmatpush1.bf16.msra.mxu0 %v1131
        %1156 = vmatprep.subr.bf16.mxu0 0
        %1157 = vmatpush1.bf16.msra.mxu0 0
        %1158 = vmatprep.subr.bf16.mxu0 0
        %1159 = vmatpush1.bf16.msra.mxu0 0
        %1160 = vmatprep.subr.bf16.mxu0 0
        %1161 = vmatpush1.bf16.msra.mxu0 0
        %1162 = vmatprep.subr.bf16.mxu0 0
        %1163 = vmatpush1.bf16.msra.mxu0 0
        %1164 = vmatprep.subr.bf16.mxu0 0
        %1165 = vmatpush1.bf16.msra.mxu0 0
        %1166 = vmatprep.subr.bf16.mxu0 0
        %1167 = vmatpush1.bf16.msra.mxu0 0
        %1168 = vmatprep.subr.bf16.mxu0 0
        %1169 = vmatpush1.bf16.msra.mxu0 0
        %1170 = vmatprep.subr.bf16.mxu0 0
        %1171 = vmatpush1.bf16.msra.mxu0 0
        %1172 = vmatprep.mubr.bf16.mxu0 0
        %1173 = vmatmul.mubr.bf16.gmra.mrb[0].mxu0 %v929
        %v1174 = vpop.f32.mrb[0].mxu0
        %v1175 = vadd.f32 0.0, %v1174
        %v1176 = vpop.f32.mrb[0].mxu0
        %v1177 = vpop.f32.mrb[0].mxu0
        %v1178 = vadd.f32 0.0, %v1177
        %v1179 = vpop.f32.mrb[0].mxu0
        %1180 = vmatprep.mubr.bf16.mxu0 0
        %1181 = vmatmul.mubr.bf16.gmra.mrb[0].mxu0 %v930
        %v1182 = vpop.f32.mrb[0].mxu0
        %v1183 = vadd.f32 0.0, %v1182
        %v1184 = vpop.f32.mrb[0].mxu0
        %v1185 = vpop.f32.mrb[0].mxu0
        %v1186 = vadd.f32 0.0, %v1185
        %v1187 = vpop.f32.mrb[0].mxu0
        %1188 = vdwg.mxu0
        %vm1189 = vcmask 261120
        %v1191 = vsel %vm1189, %v1074, 0
        %v1194 = vsel %vm1189, %v1075, 0
        %1196 = vmatprep.subr.bf16.mxu0 0
        %1197 = vmatpush1.bf16.msra.mxu0 %v1072
        %1198 = vmatprep.subr.bf16.mxu0 0
        %1199 = vmatpush1.bf16.msra.mxu0 %v1073
        %1200 = vmatprep.subr.bf16.mxu0 0
        %1201 = vmatpush1.bf16.msra.mxu0 0
        %1202 = vmatprep.subr.bf16.mxu0 0
        %1203 = vmatpush1.bf16.msra.mxu0 0
        %1204 = vmatprep.subr.bf16.mxu0 0
        %1205 = vmatpush1.bf16.msra.mxu0 0
        %1206 = vmatprep.subr.bf16.mxu0 0
        %1207 = vmatpush1.bf16.msra.mxu0 0
        %1208 = vmatprep.subr.bf16.mxu0 0
        %1209 = vmatpush1.bf16.msra.mxu0 0
        %1210 = vmatprep.subr.bf16.mxu0 0
        %1211 = vmatpush1.bf16.msra.mxu0 0
        %1212 = vmatprep.subr.bf16.mxu0 0
        %1213 = vmatpush1.bf16.msra.mxu0 0
        %1214 = vmatprep.subr.bf16.mxu0 0
        %1215 = vmatpush1.bf16.msra.mxu0 0
        %1216 = vmatprep.subr.bf16.mxu0 0
        %1217 = vmatpush1.bf16.msra.mxu0 0
        %1218 = vmatprep.subr.bf16.mxu0 0
        %1219 = vmatpush1.bf16.msra.mxu0 0
        %1220 = vmatprep.subr.bf16.mxu0 0
        %1221 = vmatpush1.bf16.msra.mxu0 0
        %1222 = vmatprep.subr.bf16.mxu0 0
        %1223 = vmatpush1.bf16.msra.mxu0 0
        %1224 = vmatprep.subr.bf16.mxu0 0
        %1225 = vmatpush1.bf16.msra.mxu0 0
        %1226 = vmatprep.subr.bf16.mxu0 0
        %1227 = vmatpush1.bf16.msra.mxu0 0
        %1228 = vmatprep.mubr.bf16.mxu0 0
        %1229 = vmatmul.mubr.bf16.gmra.mrb[0].mxu0 %v1191
        %v1230 = vpop.f32.mrb[0].mxu0
        %v1231 = vadd.f32 %v1175, %v1230
        %v1232 = vpop.f32.mrb[0].mxu0
        %v1233 = vpop.f32.mrb[0].mxu0
        %v1234 = vadd.f32 %v1178, %v1233
        %v1235 = vpop.f32.mrb[0].mxu0
        %1236 = vmatprep.mubr.bf16.mxu0 0
        %1237 = vmatmul.mubr.bf16.gmra.mrb[0].mxu0 %v1194
        %v1238 = vpop.f32.mrb[0].mxu0
        %v1239 = vadd.f32 %v1183, %v1238
        %v1240 = vpop.f32.mrb[0].mxu0
        %v1241 = vpop.f32.mrb[0].mxu0
        %v1242 = vadd.f32 %v1186, %v1241
        %v1243 = vpop.f32.mrb[0].mxu0
        %1244 = vdwg.mxu0
        %v1245 = vlaneseq
        %v1246 = vshrl.u32 %v1245, 7
        %v1247 = vsub.s32 0, %v1246
        %v1248 = vrot.slane %v931, %v1247
        %v1249 = vadd.f32 %v1231, %v1248
        %v1250 = vadd.f32 %v1234, %v1248
        %v1251 = vadd.f32 %v1239, %v1248
        %v1252 = vadd.f32 %v1242, %v1248
        %v1253 = vmax.f32 %v1249, 0.0
        %v1254 = vmax.f32 %v1250, 0.0
        %v1255 = vmax.f32 %v1251, 0.0
        %v1256 = vmax.f32 %v1252, 0.0
        %v1257 = vpack.c.bf16 %v1254, %v1253
        %v1258 = vpack.c.bf16 %v1256, %v1255
        %v1259 = vld [vmem:[%s611] sm:$0xf]
        %v1260 = vld [vmem:[%s611 + $0x4] sm:$0xf]
        %v1261 = vld [vmem:[%s611 + $0x8] sm:$0xf]
        %v1262 = vld [vmem:[%s611 + $0xc] sm:$0xf]
        %v1263 = vld [vmem:[%s611 + $0x10] sm:$0xf]
        %v1264 = vld [vmem:[%s611 + $0x14] sm:$0xf]
        %v1265 = vld [vmem:[%s611 + $0x18] sm:$0xf]
        %v1266 = vld [vmem:[%s611 + $0x1c] sm:$0xf]
        %v1267 = vld [vmem:[%s611 + $0x20] sm:$0xf]
        %v1268 = vld [vmem:[%s611 + $0x24] sm:$0xf]
        %v1269 = vld [vmem:[%s611 + $0x28] sm:$0xf]
        %v1270 = vld [vmem:[%s611 + $0x2c] sm:$0xf]
        %v1271 = vld [vmem:[%s611 + $0x30] sm:$0xf]
        %v1272 = vld [vmem:[%s611 + $0x34] sm:$0xf]
        %v1273 = vld [vmem:[%s611 + $0x38] sm:$0xf]
        %v1274 = vld [vmem:[%s611 + $0x3c] sm:$0xf]
        %v1275 = vlaneseq
        %v1276 = vshrl.u32 %v1275, 7
        %v1277 = vsub.s32 1, %v1276
        %v1278 = vrot.slane %v931, %v1277
        %v1295 = vunpack.c.l.b16 %v1259
        %v1296 = vunpack.c.l.b16 %v1260
        %v1297 = vunpack.c.l.b16 %v1261
        %v1298 = vunpack.c.l.b16 %v1262
        %v1299 = vunpack.c.l.b16 %v1263
        %v1300 = vunpack.c.l.b16 %v1264
        %v1301 = vunpack.c.l.b16 %v1265
        %v1302 = vunpack.c.l.b16 %v1266
        %v1303 = vunpack.c.l.b16 %v1267
        %v1304 = vunpack.c.l.b16 %v1268
        %v1305 = vunpack.c.l.b16 %v1269
        %v1306 = vunpack.c.l.b16 %v1270
        %v1307 = vunpack.c.l.b16 %v1271
        %v1308 = vunpack.c.l.b16 %v1272
        %v1309 = vunpack.c.l.b16 %v1273
        %v1310 = vunpack.c.l.b16 %v1274
        %v1311 = vpack.c.b16 %v1296, %v1295
        %v1312 = vpack.c.b16 %v1298, %v1297
        %v1313 = vpack.c.b16 %v1300, %v1299
        %v1314 = vpack.c.b16 %v1302, %v1301
        %v1315 = vpack.c.b16 %v1304, %v1303
        %v1316 = vpack.c.b16 %v1306, %v1305
        %v1317 = vpack.c.b16 %v1308, %v1307
        %v1318 = vpack.c.b16 %v1310, %v1309
        %1327 = vmatprep.subr.bf16.mxu0 0
        %1328 = vmatpush1.bf16.msra.mxu0 %v1311
        %1329 = vmatprep.subr.bf16.mxu0 0
        %1330 = vmatpush1.bf16.msra.mxu0 %v1312
        %1331 = vmatprep.subr.bf16.mxu0 0
        %1332 = vmatpush1.bf16.msra.mxu0 %v1313
        %1333 = vmatprep.subr.bf16.mxu0 0
        %1334 = vmatpush1.bf16.msra.mxu0 %v1314
        %1335 = vmatprep.subr.bf16.mxu0 0
        %1336 = vmatpush1.bf16.msra.mxu0 %v1315
        %1337 = vmatprep.subr.bf16.mxu0 0
        %1338 = vmatpush1.bf16.msra.mxu0 %v1316
        %1339 = vmatprep.subr.bf16.mxu0 0
        %1340 = vmatpush1.bf16.msra.mxu0 %v1317
        %1341 = vmatprep.subr.bf16.mxu0 0
        %1342 = vmatpush1.bf16.msra.mxu0 %v1318
        %1343 = vmatprep.subr.bf16.mxu0 0
        %1344 = vmatpush1.bf16.msra.mxu0 0
        %1345 = vmatprep.subr.bf16.mxu0 0
        %1346 = vmatpush1.bf16.msra.mxu0 0
        %1347 = vmatprep.subr.bf16.mxu0 0
        %1348 = vmatpush1.bf16.msra.mxu0 0
        %1349 = vmatprep.subr.bf16.mxu0 0
        %1350 = vmatpush1.bf16.msra.mxu0 0
        %1351 = vmatprep.subr.bf16.mxu0 0
        %1352 = vmatpush1.bf16.msra.mxu0 0
        %1353 = vmatprep.subr.bf16.mxu0 0
        %1354 = vmatpush1.bf16.msra.mxu0 0
        %1355 = vmatprep.subr.bf16.mxu0 0
        %1356 = vmatpush1.bf16.msra.mxu0 0
        %1357 = vmatprep.subr.bf16.mxu0 0
        %1358 = vmatpush1.bf16.msra.mxu0 0
        %1359 = vmatprep.mubr.bf16.mxu0 0
        %1360 = vmatmul.mubr.bf16.gmra.mrb[0].mxu0 %v1257
        %v1361 = vpop.f32.mrb[0].mxu0
        %v1362 = vadd.f32 %v1278, %v1361
        %v1363 = vpop.f32.mrb[0].mxu0
        %v1364 = vpop.f32.mrb[0].mxu0
        %v1365 = vadd.f32 %v1278, %v1364
        %v1366 = vpop.f32.mrb[0].mxu0
        %1367 = vmatprep.mubr.bf16.mxu0 0
        %1368 = vmatmul.mubr.bf16.gmra.mrb[0].mxu0 %v1258
        %v1369 = vpop.f32.mrb[0].mxu0
        %v1370 = vadd.f32 %v1278, %v1369
        %v1371 = vpop.f32.mrb[0].mxu0
        %v1372 = vpop.f32.mrb[0].mxu0
        %v1373 = vadd.f32 %v1278, %v1372
        %v1374 = vpop.f32.mrb[0].mxu0
        %1375 = vdwg.mxu0
        %v1376 = vmax.f32 %v1362, 0.0
        %v1377 = vmax.f32 %v1365, 0.0
        %v1378 = vmax.f32 %v1370, 0.0
        %v1379 = vmax.f32 %v1373, 0.0
        %v1380 = vpack.c.bf16 %v1377, %v1376
        %v1381 = vpack.c.bf16 %v1379, %v1378
        %v1382 = vld [vmem:[%s620] sm:$0xf]
        %v1383 = vld [vmem:[%s620 + $0x4] sm:$0xf]
        %v1384 = vld [vmem:[%s620 + $0x8] sm:$0xf]
        %v1385 = vld [vmem:[%s620 + $0xc] sm:$0xf]
        %v1386 = vld [vmem:[%s620 + $0x10] sm:$0xf]
        %v1387 = vld [vmem:[%s620 + $0x14] sm:$0xf]
        %v1388 = vld [vmem:[%s620 + $0x18] sm:$0xf]
        %v1389 = vld [vmem:[%s620 + $0x1c] sm:$0xf]
        %v1390 = vld [vmem:[%s620 + $0x20] sm:$0xf]
        %v1391 = vld [vmem:[%s620 + $0x24] sm:$0xf]
        %v1392 = vld [vmem:[%s620 + $0x28] sm:$0xf]
        %v1393 = vld [vmem:[%s620 + $0x2c] sm:$0xf]
        %v1394 = vld [vmem:[%s620 + $0x30] sm:$0xf]
        %v1395 = vld [vmem:[%s620 + $0x34] sm:$0xf]
        %v1396 = vld [vmem:[%s620 + $0x38] sm:$0xf]
        %v1397 = vld [vmem:[%s620 + $0x3c] sm:$0xf]
        %v1398 = vlaneseq
        %v1399 = vshrl.u32 %v1398, 7
        %v1400 = vsub.s32 2, %v1399
        %v1401 = vrot.slane %v931, %v1400
        %v1418 = vunpack.c.l.b16 %v1382
        %v1419 = vunpack.c.l.b16 %v1383
        %v1420 = vunpack.c.l.b16 %v1384
        %v1421 = vunpack.c.l.b16 %v1385
        %v1422 = vunpack.c.l.b16 %v1386
        %v1423 = vunpack.c.l.b16 %v1387
        %v1424 = vunpack.c.l.b16 %v1388
        %v1425 = vunpack.c.l.b16 %v1389
        %v1426 = vunpack.c.l.b16 %v1390
        %v1427 = vunpack.c.l.b16 %v1391
        %v1428 = vunpack.c.l.b16 %v1392
        %v1429 = vunpack.c.l.b16 %v1393
        %v1430 = vunpack.c.l.b16 %v1394
        %v1431 = vunpack.c.l.b16 %v1395
        %v1432 = vunpack.c.l.b16 %v1396
        %v1433 = vunpack.c.l.b16 %v1397
        %v1434 = vpack.c.b16 %v1419, %v1418
        %v1435 = vpack.c.b16 %v1421, %v1420
        %v1436 = vpack.c.b16 %v1423, %v1422
        %v1437 = vpack.c.b16 %v1425, %v1424
        %v1438 = vpack.c.b16 %v1427, %v1426
        %v1439 = vpack.c.b16 %v1429, %v1428
        %v1440 = vpack.c.b16 %v1431, %v1430
        %v1441 = vpack.c.b16 %v1433, %v1432
        %1450 = vmatprep.subr.bf16.mxu0 0
        %1451 = vmatpush1.bf16.msra.mxu0 %v1434
        %1452 = vmatprep.subr.bf16.mxu0 0
        %1453 = vmatpush1.bf16.msra.mxu0 %v1435
        %1454 = vmatprep.subr.bf16.mxu0 0
        %1455 = vmatpush1.bf16.msra.mxu0 %v1436
        %1456 = vmatprep.subr.bf16.mxu0 0
        %1457 = vmatpush1.bf16.msra.mxu0 %v1437
        %1458 = vmatprep.subr.bf16.mxu0 0
        %1459 = vmatpush1.bf16.msra.mxu0 %v1438
        %1460 = vmatprep.subr.bf16.mxu0 0
        %1461 = vmatpush1.bf16.msra.mxu0 %v1439
        %1462 = vmatprep.subr.bf16.mxu0 0
        %1463 = vmatpush1.bf16.msra.mxu0 %v1440
        %1464 = vmatprep.subr.bf16.mxu0 0
        %1465 = vmatpush1.bf16.msra.mxu0 %v1441
        %1466 = vmatprep.subr.bf16.mxu0 0
        %1467 = vmatpush1.bf16.msra.mxu0 0
        %1468 = vmatprep.subr.bf16.mxu0 0
        %1469 = vmatpush1.bf16.msra.mxu0 0
        %1470 = vmatprep.subr.bf16.mxu0 0
        %1471 = vmatpush1.bf16.msra.mxu0 0
        %1472 = vmatprep.subr.bf16.mxu0 0
        %1473 = vmatpush1.bf16.msra.mxu0 0
        %1474 = vmatprep.subr.bf16.mxu0 0
        %1475 = vmatpush1.bf16.msra.mxu0 0
        %1476 = vmatprep.subr.bf16.mxu0 0
        %1477 = vmatpush1.bf16.msra.mxu0 0
        %1478 = vmatprep.subr.bf16.mxu0 0
        %1479 = vmatpush1.bf16.msra.mxu0 0
        %1480 = vmatprep.subr.bf16.mxu0 0
        %1481 = vmatpush1.bf16.msra.mxu0 0
        %1482 = vmatprep.mubr.bf16.mxu0 0
        %1483 = vmatmul.mubr.bf16.gmra.mrb[0].mxu0 %v1380
        %v1484 = vpop.f32.mrb[0].mxu0
        %v1485 = vadd.f32 %v1401, %v1484
        %v1486 = vpop.f32.mrb[0].mxu0
        %v1487 = vpop.f32.mrb[0].mxu0
        %v1488 = vadd.f32 %v1401, %v1487
        %v1489 = vpop.f32.mrb[0].mxu0
        %1490 = vmatprep.mubr.bf16.mxu0 0
        %1491 = vmatmul.mubr.bf16.gmra.mrb[0].mxu0 %v1381
        %v1492 = vpop.f32.mrb[0].mxu0
        %v1493 = vadd.f32 %v1401, %v1492
        %v1494 = vpop.f32.mrb[0].mxu0
        %v1495 = vpop.f32.mrb[0].mxu0
        %v1496 = vadd.f32 %v1401, %v1495
        %v1497 = vpop.f32.mrb[0].mxu0
        %1498 = vdwg.mxu0
        %1499 = vadd.xlane.f32.xlu0 %v1485
        %v1500 = vpop.xlane.xlu0 %1499
        %1501 = vadd.xlane.f32.xlu0 %v1488
        %v1502 = vpop.xlane.xlu0 %1501
        %1503 = vadd.xlane.f32.xlu0 %v1493
        %v1504 = vpop.xlane.xlu0 %1503
        %1505 = vadd.xlane.f32.xlu0 %v1496
        %v1506 = vpop.xlane.xlu0 %1505
        %v1507 = vrcp.pop 128.0
        %v1508 = vmul.f32 %v1500, %v1507
        %v1509 = vmul.f32 %v1502, %v1507
        %v1510 = vmul.f32 %v1504, %v1507
        %v1511 = vmul.f32 %v1506, %v1507
        %v1512 = vsub.f32 %v1485, %v1508
        %v1513 = vsub.f32 %v1488, %v1509
        %v1514 = vsub.f32 %v1493, %v1510
        %v1515 = vsub.f32 %v1496, %v1511
        %v1516 = vmul.f32 %v1512, %v1512
        %v1517 = vmul.f32 %v1513, %v1513
        %v1518 = vmul.f32 %v1514, %v1514
        %v1519 = vmul.f32 %v1515, %v1515
        %1520 = vadd.xlane.f32.xlu0 %v1516
        %v1521 = vpop.xlane.xlu0 %1520
        %1522 = vadd.xlane.f32.xlu0 %v1517
        %v1523 = vpop.xlane.xlu0 %1522
        %1524 = vadd.xlane.f32.xlu0 %v1518
        %v1525 = vpop.xlane.xlu0 %1524
        %1526 = vadd.xlane.f32.xlu0 %v1519
        %v1527 = vpop.xlane.xlu0 %1526
        %v1528 = vmul.f32 %v1521, %v1507
        %v1529 = vmul.f32 %v1523, %v1507
        %v1530 = vmul.f32 %v1525, %v1507
        %v1531 = vmul.f32 %v1527, %v1507
        %v1532 = vadd.f32 %v1528, 1e-05
        %v1533 = vadd.f32 %v1529, 1e-05
        %v1534 = vadd.f32 %v1530, 1e-05
        %v1535 = vadd.f32 %v1531, 1e-05
        %v1536 = vrsqrt.pop %v1532
        %v1537 = vrsqrt.pop %v1533
        %v1538 = vrsqrt.pop %v1534
        %v1539 = vrsqrt.pop %v1535
        %v1540 = vmul.f32 %v1512, %v1536
        %v1541 = vmul.f32 %v1513, %v1537
        %v1542 = vmul.f32 %v1514, %v1538
        %v1543 = vmul.f32 %v1515, %v1539
        %v1544 = vlaneseq
        %v1545 = vshrl.u32 %v1544, 7
        %v1546 = vsub.s32 3, %v1545
        %v1547 = vrot.slane %v931, %v1546
        %v1548 = vmul.f32 %v1540, %v1547
        %v1549 = vmul.f32 %v1541, %v1547
        %v1550 = vmul.f32 %v1542, %v1547
        %v1551 = vmul.f32 %v1543, %v1547
        %v1552 = vlaneseq
        %v1553 = vshrl.u32 %v1552, 7
        %v1554 = vsub.s32 4, %v1553
        %v1555 = vrot.slane %v931, %v1554
        %v1556 = vadd.f32 %v1548, %v1555
        %v1557 = vadd.f32 %v1549, %v1555
        %v1558 = vadd.f32 %v1550, %v1555
        %v1559 = vadd.f32 %v1551, %v1555
        %1560 = vst [vmem:[#allocation20] sm:$0xff] %v1556
        %1561 = vst [vmem:[#allocation20 + $0x8] sm:$0xff] %v1557
        %1562 = vst [vmem:[#allocation20 + $0x10] sm:$0xff] %v1558
        %1563 = vst [vmem:[#allocation20 + $0x18] sm:$0xff] %v1559
        %v1564 = vpack.c.bf16 %v1557, %v1556
        %v1565 = vpack.c.bf16 %v1559, %v1558
        %v1566 = vld [vmem:[%s638] sm:$0xf]
        %v1567 = vld [vmem:[%s638 + $0x4] sm:$0xf]
        %v1568 = vld [vmem:[%s638 + $0x8] sm:$0xf]
        %v1569 = vld [vmem:[%s638 + $0xc] sm:$0xf]
        %v1570 = vld [vmem:[%s638 + $0x10] sm:$0xf]
        %v1571 = vld [vmem:[%s638 + $0x14] sm:$0xf]
        %v1572 = vld [vmem:[%s638 + $0x18] sm:$0xf]
        %v1573 = vld [vmem:[%s638 + $0x1c] sm:$0xf]
        %v1574 = vld [vmem:[%s638 + $0x20] sm:$0xf]
        %v1575 = vld [vmem:[%s638 + $0x24] sm:$0xf]
        %v1576 = vld [vmem:[%s638 + $0x28] sm:$0xf]
        %v1577 = vld [vmem:[%s638 + $0x2c] sm:$0xf]
        %v1578 = vld [vmem:[%s638 + $0x30] sm:$0xf]
        %v1579 = vld [vmem:[%s638 + $0x34] sm:$0xf]
        %v1580 = vld [vmem:[%s638 + $0x38] sm:$0xf]
        %v1581 = vld [vmem:[%s638 + $0x3c] sm:$0xf]
        %v1598 = vunpack.c.l.b16 %v1566
        %v1599 = vunpack.c.l.b16 %v1567
        %v1600 = vunpack.c.l.b16 %v1568
        %v1601 = vunpack.c.l.b16 %v1569
        %v1602 = vunpack.c.l.b16 %v1570
        %v1603 = vunpack.c.l.b16 %v1571
        %v1604 = vunpack.c.l.b16 %v1572
        %v1605 = vunpack.c.l.b16 %v1573
        %v1606 = vunpack.c.l.b16 %v1574
        %v1607 = vunpack.c.l.b16 %v1575
        %v1608 = vunpack.c.l.b16 %v1576
        %v1609 = vunpack.c.l.b16 %v1577
        %v1610 = vunpack.c.l.b16 %v1578
        %v1611 = vunpack.c.l.b16 %v1579
        %v1612 = vunpack.c.l.b16 %v1580
        %v1613 = vunpack.c.l.b16 %v1581
        %v1614 = vpack.c.b16 %v1599, %v1598
        %v1615 = vpack.c.b16 %v1601, %v1600
        %v1616 = vpack.c.b16 %v1603, %v1602
        %v1617 = vpack.c.b16 %v1605, %v1604
        %v1618 = vpack.c.b16 %v1607, %v1606
        %v1619 = vpack.c.b16 %v1609, %v1608
        %v1620 = vpack.c.b16 %v1611, %v1610
        %v1621 = vpack.c.b16 %v1613, %v1612
        %1630 = vmatprep.subr.bf16.mxu0 0
        %1631 = vmatpush1.bf16.msra.mxu0 %v1614
        %1632 = vmatprep.subr.bf16.mxu0 0
        %1633 = vmatpush1.bf16.msra.mxu0 %v1615
        %1634 = vmatprep.subr.bf16.mxu0 0
        %1635 = vmatpush1.bf16.msra.mxu0 %v1616
        %1636 = vmatprep.subr.bf16.mxu0 0
        %1637 = vmatpush1.bf16.msra.mxu0 %v1617
        %1638 = vmatprep.subr.bf16.mxu0 0
        %1639 = vmatpush1.bf16.msra.mxu0 %v1618
        %1640 = vmatprep.subr.bf16.mxu0 0
        %1641 = vmatpush1.bf16.msra.mxu0 %v1619
        %1642 = vmatprep.subr.bf16.mxu0 0
        %1643 = vmatpush1.bf16.msra.mxu0 %v1620
        %1644 = vmatprep.subr.bf16.mxu0 0
        %1645 = vmatpush1.bf16.msra.mxu0 %v1621
        %1646 = vmatprep.subr.bf16.mxu0 0
        %1647 = vmatpush1.bf16.msra.mxu0 0
        %1648 = vmatprep.subr.bf16.mxu0 0
        %1649 = vmatpush1.bf16.msra.mxu0 0
        %1650 = vmatprep.subr.bf16.mxu0 0
        %1651 = vmatpush1.bf16.msra.mxu0 0
        %1652 = vmatprep.subr.bf16.mxu0 0
        %1653 = vmatpush1.bf16.msra.mxu0 0
        %1654 = vmatprep.subr.bf16.mxu0 0
        %1655 = vmatpush1.bf16.msra.mxu0 0
        %1656 = vmatprep.subr.bf16.mxu0 0
        %1657 = vmatpush1.bf16.msra.mxu0 0
        %1658 = vmatprep.subr.bf16.mxu0 0
        %1659 = vmatpush1.bf16.msra.mxu0 0
        %1660 = vmatprep.subr.bf16.mxu0 0
        %1661 = vmatpush1.bf16.msra.mxu0 0
        %1662 = vmatprep.mubr.bf16.mxu0 0
        %1663 = vmatmul.mubr.bf16.gmra.mrb[0].mxu0 %v1564
        %v1664 = vpop.f32.mrb[0].mxu0
        %v1665 = vadd.f32 0.0, %v1664
        %v1666 = vpop.f32.mrb[0].mxu0
        %v1667 = vpop.f32.mrb[0].mxu0
        %v1668 = vadd.f32 0.0, %v1667
        %v1669 = vpop.f32.mrb[0].mxu0
        %1670 = vmatprep.mubr.bf16.mxu0 0
        %1671 = vmatmul.mubr.bf16.gmra.mrb[0].mxu0 %v1565
        %v1672 = vpop.f32.mrb[0].mxu0
        %v1673 = vadd.f32 0.0, %v1672
        %v1674 = vpop.f32.mrb[0].mxu0
        %v1675 = vpop.f32.mrb[0].mxu0
        %v1676 = vadd.f32 0.0, %v1675
        %v1677 = vpop.f32.mrb[0].mxu0
        %1678 = vdwg.mxu0
        %v1679 = vld [vmem:[#allocation3] sm:$0xff]
        %v1680 = vpack.c.bf16 %v1668, %v1665
        %v1681 = vpack.c.bf16 %v1676, %v1673
        %v1683 = vsel %vm1189, %v1679, 0
        %1685 = vmatprep.subr.bf16.mxu0 0
        %1686 = vmatpush1.bf16.msra.mxu0 %v1680
        %1687 = vmatprep.subr.bf16.mxu0 0
        %1688 = vmatpush1.bf16.msra.mxu0 %v1681
        %1689 = vmatprep.subr.bf16.mxu0 0
        %1690 = vmatpush1.bf16.msra.mxu0 0
        %1691 = vmatprep.subr.bf16.mxu0 0
        %1692 = vmatpush1.bf16.msra.mxu0 0
        %1693 = vmatprep.subr.bf16.mxu0 0
        %1694 = vmatpush1.bf16.msra.mxu0 0
        %1695 = vmatprep.subr.bf16.mxu0 0
        %1696 = vmatpush1.bf16.msra.mxu0 0
        %1697 = vmatprep.subr.bf16.mxu0 0
        %1698 = vmatpush1.bf16.msra.mxu0 0
        %1699 = vmatprep.subr.bf16.mxu0 0
        %1700 = vmatpush1.bf16.msra.mxu0 0
        %1701 = vmatprep.subr.bf16.mxu0 0
        %1702 = vmatpush1.bf16.msra.mxu0 0
        %1703 = vmatprep.subr.bf16.mxu0 0
        %1704 = vmatpush1.bf16.msra.mxu0 0
        %1705 = vmatprep.subr.bf16.mxu0 0
        %1706 = vmatpush1.bf16.msra.mxu0 0
        %1707 = vmatprep.subr.bf16.mxu0 0
        %1708 = vmatpush1.bf16.msra.mxu0 0
        %1709 = vmatprep.subr.bf16.mxu0 0
        %1710 = vmatpush1.bf16.msra.mxu0 0
        %1711 = vmatprep.subr.bf16.mxu0 0
        %1712 = vmatpush1.bf16.msra.mxu0 0
        %1713 = vmatprep.subr.bf16.mxu0 0
        %1714 = vmatpush1.bf16.msra.mxu0 0
        %1715 = vmatprep.subr.bf16.mxu0 0
        %1716 = vmatpush1.bf16.msra.mxu0 0
        %1717 = vmatprep.mubr.bf16.mxu0 0
        %1718 = vmatmul.mubr.bf16.gmra.mrb[0].mxu0 %v1683
        %v1719 = vpop.f32.mrb[0].mxu0
        %v1720 = vadd.f32 0.0, %v1719
        %v1721 = vpop.f32.mrb[0].mxu0
        %v1722 = vpop.f32.mrb[0].mxu0
        %v1723 = vadd.f32 0.0, %v1722
        %v1724 = vpop.f32.mrb[0].mxu0
        %1725 = vdwg.mxu0
        %v1726 = vld [vmem:[%s629] sm:$0xf]
        %v1727 = vld [vmem:[%s629 + $0x4] sm:$0xf]
        %v1728 = vld [vmem:[%s629 + $0x8] sm:$0xf]
        %v1729 = vld [vmem:[%s629 + $0xc] sm:$0xf]
        %v1730 = vld [vmem:[%s629 + $0x10] sm:$0xf]
        %v1731 = vld [vmem:[%s629 + $0x14] sm:$0xf]
        %v1732 = vld [vmem:[%s629 + $0x18] sm:$0xf]
        %v1733 = vld [vmem:[%s629 + $0x1c] sm:$0xf]
        %v1734 = vld [vmem:[%s629 + $0x20] sm:$0xf]
        %v1735 = vld [vmem:[%s629 + $0x24] sm:$0xf]
        %v1736 = vld [vmem:[%s629 + $0x28] sm:$0xf]
        %v1737 = vld [vmem:[%s629 + $0x2c] sm:$0xf]
        %v1738 = vld [vmem:[%s629 + $0x30] sm:$0xf]
        %v1739 = vld [vmem:[%s629 + $0x34] sm:$0xf]
        %v1740 = vld [vmem:[%s629 + $0x38] sm:$0xf]
        %v1741 = vld [vmem:[%s629 + $0x3c] sm:$0xf]
        %v1758 = vunpack.c.l.b16 %v1726
        %v1759 = vunpack.c.l.b16 %v1727
        %v1760 = vunpack.c.l.b16 %v1728
        %v1761 = vunpack.c.l.b16 %v1729
        %v1762 = vunpack.c.l.b16 %v1730
        %v1763 = vunpack.c.l.b16 %v1731
        %v1764 = vunpack.c.l.b16 %v1732
        %v1765 = vunpack.c.l.b16 %v1733
        %v1766 = vunpack.c.l.b16 %v1734
        %v1767 = vunpack.c.l.b16 %v1735
        %v1768 = vunpack.c.l.b16 %v1736
        %v1769 = vunpack.c.l.b16 %v1737
        %v1770 = vunpack.c.l.b16 %v1738
        %v1771 = vunpack.c.l.b16 %v1739
        %v1772 = vunpack.c.l.b16 %v1740
        %v1773 = vunpack.c.l.b16 %v1741
        %v1774 = vpack.c.b16 %v1759, %v1758
        %v1775 = vpack.c.b16 %v1761, %v1760
        %v1776 = vpack.c.b16 %v1763, %v1762
        %v1777 = vpack.c.b16 %v1765, %v1764
        %v1778 = vpack.c.b16 %v1767, %v1766
        %v1779 = vpack.c.b16 %v1769, %v1768
        %v1780 = vpack.c.b16 %v1771, %v1770
        %v1781 = vpack.c.b16 %v1773, %v1772
        %1790 = vmatprep.subr.bf16.mxu0 0
        %1791 = vmatpush1.bf16.msra.mxu0 %v1774
        %1792 = vmatprep.subr.bf16.mxu0 0
        %1793 = vmatpush1.bf16.msra.mxu0 %v1775
        %1794 = vmatprep.subr.bf16.mxu0 0
        %1795 = vmatpush1.bf16.msra.mxu0 %v1776
        %1796 = vmatprep.subr.bf16.mxu0 0
        %1797 = vmatpush1.bf16.msra.mxu0 %v1777
        %1798 = vmatprep.subr.bf16.mxu0 0
        %1799 = vmatpush1.bf16.msra.mxu0 %v1778
        %1800 = vmatprep.subr.bf16.mxu0 0
        %1801 = vmatpush1.bf16.msra.mxu0 %v1779
        %1802 = vmatprep.subr.bf16.mxu0 0
        %1803 = vmatpush1.bf16.msra.mxu0 %v1780
        %1804 = vmatprep.subr.bf16.mxu0 0
        %1805 = vmatpush1.bf16.msra.mxu0 %v1781
        %1806 = vmatprep.subr.bf16.mxu0 0
        %1807 = vmatpush1.bf16.msra.mxu0 0
        %1808 = vmatprep.subr.bf16.mxu0 0
        %1809 = vmatpush1.bf16.msra.mxu0 0
        %1810 = vmatprep.subr.bf16.mxu0 0
        %1811 = vmatpush1.bf16.msra.mxu0 0
        %1812 = vmatprep.subr.bf16.mxu0 0
        %1813 = vmatpush1.bf16.msra.mxu0 0
        %1814 = vmatprep.subr.bf16.mxu0 0
        %1815 = vmatpush1.bf16.msra.mxu0 0
        %1816 = vmatprep.subr.bf16.mxu0 0
        %1817 = vmatpush1.bf16.msra.mxu0 0
        %1818 = vmatprep.subr.bf16.mxu0 0
        %1819 = vmatpush1.bf16.msra.mxu0 0
        %1820 = vmatprep.subr.bf16.mxu0 0
        %1821 = vmatpush1.bf16.msra.mxu0 0
        %1822 = vmatprep.mubr.bf16.mxu0 0
        %1823 = vmatmul.mubr.bf16.gmra.mrb[0].mxu0 %v928
        %v1824 = vpop.f32.mrb[0].mxu0
        %v1825 = vadd.f32 %v1720, %v1824
        %v1826 = vpop.f32.mrb[0].mxu0
        %v1827 = vpop.f32.mrb[0].mxu0
        %v1828 = vadd.f32 %v1723, %v1827
        %v1829 = vpop.f32.mrb[0].mxu0
        %1830 = vdwg.mxu0
        %v1831 = vlaneseq
        %v1832 = vshrl.u32 %v1831, 7
        %v1833 = vsub.s32 5, %v1832
        %v1834 = vrot.slane %v931, %v1833
        %v1835 = vadd.f32 %v1825, %v1834
        %v1836 = vadd.f32 %v1828, %v1834
        %v1837 = vmax.f32 %v1835, 0.0
        %v1838 = vmax.f32 %v1836, 0.0
        %v1839 = vpack.c.bf16 %v1838, %v1837
        %v1840 = vld [vmem:[%s647] sm:$0xf]
        %v1841 = vld [vmem:[%s647 + $0x4] sm:$0xf]
        %v1842 = vld [vmem:[%s647 + $0x8] sm:$0xf]
        %v1843 = vld [vmem:[%s647 + $0xc] sm:$0xf]
        %v1844 = vld [vmem:[%s647 + $0x10] sm:$0xf]
        %v1845 = vld [vmem:[%s647 + $0x14] sm:$0xf]
        %v1846 = vld [vmem:[%s647 + $0x18] sm:$0xf]
        %v1847 = vld [vmem:[%s647 + $0x1c] sm:$0xf]
        %v1848 = vld [vmem:[%s647 + $0x20] sm:$0xf]
        %v1849 = vld [vmem:[%s647 + $0x24] sm:$0xf]
        %v1850 = vld [vmem:[%s647 + $0x28] sm:$0xf]
        %v1851 = vld [vmem:[%s647 + $0x2c] sm:$0xf]
        %v1852 = vld [vmem:[%s647 + $0x30] sm:$0xf]
        %v1853 = vld [vmem:[%s647 + $0x34] sm:$0xf]
        %v1854 = vld [vmem:[%s647 + $0x38] sm:$0xf]
        %v1855 = vld [vmem:[%s647 + $0x3c] sm:$0xf]
        %v1856 = vlaneseq
        %v1857 = vshrl.u32 %v1856, 7
        %v1858 = vsub.s32 6, %v1857
        %v1859 = vrot.slane %v931, %v1858
        %v1876 = vunpack.c.l.b16 %v1840
        %v1877 = vunpack.c.l.b16 %v1841
        %v1878 = vunpack.c.l.b16 %v1842
        %v1879 = vunpack.c.l.b16 %v1843
        %v1880 = vunpack.c.l.b16 %v1844
        %v1881 = vunpack.c.l.b16 %v1845
        %v1882 = vunpack.c.l.b16 %v1846
        %v1883 = vunpack.c.l.b16 %v1847
        %v1884 = vunpack.c.l.b16 %v1848
        %v1885 = vunpack.c.l.b16 %v1849
        %v1886 = vunpack.c.l.b16 %v1850
        %v1887 = vunpack.c.l.b16 %v1851
        %v1888 = vunpack.c.l.b16 %v1852
        %v1889 = vunpack.c.l.b16 %v1853
        %v1890 = vunpack.c.l.b16 %v1854
        %v1891 = vunpack.c.l.b16 %v1855
        %v1892 = vpack.c.b16 %v1877, %v1876
        %v1893 = vpack.c.b16 %v1879, %v1878
        %v1894 = vpack.c.b16 %v1881, %v1880
        %v1895 = vpack.c.b16 %v1883, %v1882
        %v1896 = vpack.c.b16 %v1885, %v1884
        %v1897 = vpack.c.b16 %v1887, %v1886
        %v1898 = vpack.c.b16 %v1889, %v1888
        %v1899 = vpack.c.b16 %v1891, %v1890
        %1908 = vmatprep.subr.bf16.mxu0 0
        %1909 = vmatpush1.bf16.msra.mxu0 %v1892
        %1910 = vmatprep.subr.bf16.mxu0 0
        %1911 = vmatpush1.bf16.msra.mxu0 %v1893
        %1912 = vmatprep.subr.bf16.mxu0 0
        %1913 = vmatpush1.bf16.msra.mxu0 %v1894
        %1914 = vmatprep.subr.bf16.mxu0 0
        %1915 = vmatpush1.bf16.msra.mxu0 %v1895
        %1916 = vmatprep.subr.bf16.mxu0 0
        %1917 = vmatpush1.bf16.msra.mxu0 %v1896
        %1918 = vmatprep.subr.bf16.mxu0 0
        %1919 = vmatpush1.bf16.msra.mxu0 %v1897
        %1920 = vmatprep.subr.bf16.mxu0 0
        %1921 = vmatpush1.bf16.msra.mxu0 %v1898
        %1922 = vmatprep.subr.bf16.mxu0 0
        %1923 = vmatpush1.bf16.msra.mxu0 %v1899
        %1924 = vmatprep.subr.bf16.mxu0 0
        %1925 = vmatpush1.bf16.msra.mxu0 0
        %1926 = vmatprep.subr.bf16.mxu0 0
        %1927 = vmatpush1.bf16.msra.mxu0 0
        %1928 = vmatprep.subr.bf16.mxu0 0
        %1929 = vmatpush1.bf16.msra.mxu0 0
        %1930 = vmatprep.subr.bf16.mxu0 0
        %1931 = vmatpush1.bf16.msra.mxu0 0
        %1932 = vmatprep.subr.bf16.mxu0 0
        %1933 = vmatpush1.bf16.msra.mxu0 0
        %1934 = vmatprep.subr.bf16.mxu0 0
        %1935 = vmatpush1.bf16.msra.mxu0 0
        %1936 = vmatprep.subr.bf16.mxu0 0
        %1937 = vmatpush1.bf16.msra.mxu0 0
        %1938 = vmatprep.subr.bf16.mxu0 0
        %1939 = vmatpush1.bf16.msra.mxu0 0
        %1940 = vmatprep.mubr.bf16.mxu0 0
        %1941 = vmatmul.mubr.bf16.gmra.mrb[0].mxu0 %v1839
        %v1942 = vpop.f32.mrb[0].mxu0
        %v1943 = vadd.f32 %v1859, %v1942
        %v1944 = vpop.f32.mrb[0].mxu0
        %v1945 = vpop.f32.mrb[0].mxu0
        %v1946 = vadd.f32 %v1859, %v1945
        %v1947 = vpop.f32.mrb[0].mxu0
        %1948 = vdwg.mxu0
        %v1949 = vmax.f32 %v1943, 0.0
        %v1950 = vmax.f32 %v1946, 0.0
        %v1951 = vpack.c.bf16 %v1950, %v1949
        %v1952 = vld [vmem:[%s656] sm:$0xf]
        %v1953 = vld [vmem:[%s656 + $0x4] sm:$0xf]
        %v1954 = vld [vmem:[%s656 + $0x8] sm:$0xf]
        %v1955 = vld [vmem:[%s656 + $0xc] sm:$0xf]
        %v1956 = vld [vmem:[%s656 + $0x10] sm:$0xf]
        %v1957 = vld [vmem:[%s656 + $0x14] sm:$0xf]
        %v1958 = vld [vmem:[%s656 + $0x18] sm:$0xf]
        %v1959 = vld [vmem:[%s656 + $0x1c] sm:$0xf]
        %v1960 = vld [vmem:[%s656 + $0x20] sm:$0xf]
        %v1961 = vld [vmem:[%s656 + $0x24] sm:$0xf]
        %v1962 = vld [vmem:[%s656 + $0x28] sm:$0xf]
        %v1963 = vld [vmem:[%s656 + $0x2c] sm:$0xf]
        %v1964 = vld [vmem:[%s656 + $0x30] sm:$0xf]
        %v1965 = vld [vmem:[%s656 + $0x34] sm:$0xf]
        %v1966 = vld [vmem:[%s656 + $0x38] sm:$0xf]
        %v1967 = vld [vmem:[%s656 + $0x3c] sm:$0xf]
        %v1968 = vlaneseq
        %v1969 = vshrl.u32 %v1968, 7
        %v1970 = vsub.s32 7, %v1969
        %v1971 = vrot.slane %v931, %v1970
        %v1988 = vunpack.c.l.b16 %v1952
        %v1989 = vunpack.c.l.b16 %v1953
        %v1990 = vunpack.c.l.b16 %v1954
        %v1991 = vunpack.c.l.b16 %v1955
        %v1992 = vunpack.c.l.b16 %v1956
        %v1993 = vunpack.c.l.b16 %v1957
        %v1994 = vunpack.c.l.b16 %v1958
        %v1995 = vunpack.c.l.b16 %v1959
        %v1996 = vunpack.c.l.b16 %v1960
        %v1997 = vunpack.c.l.b16 %v1961
        %v1998 = vunpack.c.l.b16 %v1962
        %v1999 = vunpack.c.l.b16 %v1963
        %v2000 = vunpack.c.l.b16 %v1964
        %v2001 = vunpack.c.l.b16 %v1965
        %v2002 = vunpack.c.l.b16 %v1966
        %v2003 = vunpack.c.l.b16 %v1967
        %v2004 = vpack.c.b16 %v1989, %v1988
        %v2005 = vpack.c.b16 %v1991, %v1990
        %v2006 = vpack.c.b16 %v1993, %v1992
        %v2007 = vpack.c.b16 %v1995, %v1994
        %v2008 = vpack.c.b16 %v1997, %v1996
        %v2009 = vpack.c.b16 %v1999, %v1998
        %v2010 = vpack.c.b16 %v2001, %v2000
        %v2011 = vpack.c.b16 %v2003, %v2002
        %2020 = vmatprep.subr.bf16.mxu0 0
        %2021 = vmatpush1.bf16.msra.mxu0 %v2004
        %2022 = vmatprep.subr.bf16.mxu0 0
        %2023 = vmatpush1.bf16.msra.mxu0 %v2005
        %2024 = vmatprep.subr.bf16.mxu0 0
        %2025 = vmatpush1.bf16.msra.mxu0 %v2006
        %2026 = vmatprep.subr.bf16.mxu0 0
        %2027 = vmatpush1.bf16.msra.mxu0 %v2007
        %2028 = vmatprep.subr.bf16.mxu0 0
        %2029 = vmatpush1.bf16.msra.mxu0 %v2008
        %2030 = vmatprep.subr.bf16.mxu0 0
        %2031 = vmatpush1.bf16.msra.mxu0 %v2009
        %2032 = vmatprep.subr.bf16.mxu0 0
        %2033 = vmatpush1.bf16.msra.mxu0 %v2010
        %2034 = vmatprep.subr.bf16.mxu0 0
        %2035 = vmatpush1.bf16.msra.mxu0 %v2011
        %2036 = vmatprep.subr.bf16.mxu0 0
        %2037 = vmatpush1.bf16.msra.mxu0 0
        %2038 = vmatprep.subr.bf16.mxu0 0
        %2039 = vmatpush1.bf16.msra.mxu0 0
        %2040 = vmatprep.subr.bf16.mxu0 0
        %2041 = vmatpush1.bf16.msra.mxu0 0
        %2042 = vmatprep.subr.bf16.mxu0 0
        %2043 = vmatpush1.bf16.msra.mxu0 0
        %2044 = vmatprep.subr.bf16.mxu0 0
        %2045 = vmatpush1.bf16.msra.mxu0 0
        %2046 = vmatprep.subr.bf16.mxu0 0
        %2047 = vmatpush1.bf16.msra.mxu0 0
        %2048 = vmatprep.subr.bf16.mxu0 0
        %2049 = vmatpush1.bf16.msra.mxu0 0
        %2050 = vmatprep.subr.bf16.mxu0 0
        %2051 = vmatpush1.bf16.msra.mxu0 0
        %2052 = vmatprep.mubr.bf16.mxu0 0
        %2053 = vmatmul.mubr.bf16.gmra.mrb[0].mxu0 %v1951
        %v2054 = vpop.f32.mrb[0].mxu0
        %v2055 = vadd.f32 %v1971, %v2054
        %v2056 = vpop.f32.mrb[0].mxu0
        %v2057 = vpop.f32.mrb[0].mxu0
        %v2058 = vadd.f32 %v1971, %v2057
        %v2059 = vpop.f32.mrb[0].mxu0
        %2060 = vdwg.mxu0
        %2061 = vadd.xlane.f32.xlu0 %v2055
        %v2062 = vpop.xlane.xlu0 %2061
        %2063 = vadd.xlane.f32.xlu0 %v2058
        %v2064 = vpop.xlane.xlu0 %2063
        %v2065 = vmul.f32 %v2062, %v1507
        %v2066 = vmul.f32 %v2064, %v1507
        %v2067 = vsub.f32 %v2055, %v2065
        %v2068 = vsub.f32 %v2058, %v2066
        %v2069 = vmul.f32 %v2067, %v2067
        %v2070 = vmul.f32 %v2068, %v2068
        %2071 = vadd.xlane.f32.xlu0 %v2069
        %v2072 = vpop.xlane.xlu0 %2071
        %2073 = vadd.xlane.f32.xlu0 %v2070
        %v2074 = vpop.xlane.xlu0 %2073
        %v2075 = vmul.f32 %v2072, %v1507
        %v2076 = vmul.f32 %v2074, %v1507
        %v2077 = vadd.f32 %v2075, 1e-05
        %v2078 = vadd.f32 %v2076, 1e-05
        %v2079 = vrsqrt.pop %v2077
        %v2080 = vrsqrt.pop %v2078
        %v2081 = vmul.f32 %v2067, %v2079
        %v2082 = vmul.f32 %v2068, %v2080
        %v2083 = vlaneseq
        %v2084 = vshrl.u32 %v2083, 7
        %v2085 = vsub.s32 0, %v2084
        %v2086 = vrot.slane %v932, %v2085
        %v2087 = vmul.f32 %v2081, %v2086
        %v2088 = vmul.f32 %v2082, %v2086
        %v2089 = vlaneseq
        %v2090 = vshrl.u32 %v2089, 7
        %v2091 = vsub.s32 1, %v2090
        %v2092 = vrot.slane %v932, %v2091
        %v2093 = vadd.f32 %v2087, %v2092
        %v2094 = vadd.f32 %v2088, %v2092
        %v2095 = vadd.f32 %v2093, %v922
        %v2096 = vadd.f32 %v2094, %v923
        %2097 = vst [vmem:[#allocation19] sm:$0xff] %v2095
        %2098 = vst [vmem:[#allocation19 + $0x8] sm:$0xff] %v2096
        // Predicated region
        $region173: #{processor_forward.1} parent=67 // pred_check
          %p2099 = pneg %p354
        $region174: #{processor_forward.1} parent=67 // pred_check_branch
          %2101 = sbr.rel (%p2099) target = $region176
        $region175: #{processor_forward.1} parent=67 // pred_region
          %s2103 = ssub.s32 256, 256
          %2104 = vsyncadd [#allocation7], %s2103
          %s2105 = sshll.u32 [#allocation19], 4
          %s2106 = int_to_ptr.vmem [resolvable:$true] %s2105
          %2111 = dma.vmem_to_hbm [thread:$0]  %s2106, 256, %s14, [#allocation7], 128, 128, 8
        $region176: #{processor_forward.1} parent=67 // pred_fallthru
          _
        // Predicated region
        $region177: #{processor_forward.1} parent=67 // pred_check
          %p2112 = pneg %p375
        $region178: #{processor_forward.1} parent=67 // pred_check_branch
          %2114 = sbr.rel (%p2112) target = $region180
        $region179: #{processor_forward.1} parent=67 // pred_region
          %s2116 = ssub.s32 512, 512
          %2117 = vsyncadd [#allocation21], %s2116
          %s2118 = sshll.u32 [#allocation20], 4
          %s2119 = int_to_ptr.vmem [resolvable:$true] %s2118
          %2124 = dma.vmem_to_hbm [thread:$0]  %s2119, 512, %s15, [#allocation21], 128, 128, 8
        $region180: #{processor_forward.1} parent=67 // pred_fallthru
          _
        // Predicated region
        $region181: #{processor_forward.1} parent=67 // pred_check
          %p2125 = pneg %p354
        $region182: #{processor_forward.1} parent=67 // pred_check_branch
          %2127 = sbr.rel (%p2125) target = $region184
        $region183: #{processor_forward.1} parent=67 // pred_region
          %2128 = dma.done [#allocation7], 256
        $region184: #{processor_forward.1} parent=67 // pred_fallthru
          _
        // Predicated region
        $region185: #{processor_forward.1} parent=67 // pred_check
          %p2129 = pneg %p375
        $region186: #{processor_forward.1} parent=67 // pred_check_branch
          %2131 = sbr.rel (%p2129) target = $region188
        $region187: #{processor_forward.1} parent=67 // pred_region
          %2132 = dma.done [#allocation21], 512
        $region188: #{processor_forward.1} parent=67 // pred_fallthru
          _
      $region68: #{processor_forward.1} parent=5 // pred_fallthru
        _
      %p2133 = scmp.le.s32.totalorder 2, %s39
      // Predicated region
      $region189: #{processor_forward.1} parent=5 // pred_check
        %p2134 = pneg %p2133
      $region190: #{processor_forward.1} parent=5 // pred_check_branch
        %2136 = sbr.rel (%p2134) target = $region192
      $region191: #{processor_forward.1} parent=5 // pred_region
        %s2137 = ssub.s32 %s39, 2
      $region192: #{processor_forward.1} parent=5 // pred_fallthru
        _
    $region6: #{processor_forward.1} parent=1 // loop_footer
      %s43 = sadd.s32 1, %s39
    $region7: #{processor_forward.1} parent=1 // loop_footer_branch
      %38 = sbr.rel target = $region3
    $region8: #{processor_forward.1} parent=1 // loop_exit
      _
    %2138 = vsyncpa [#allocation6], 1
    %s2139 = scalar_lea.sflag [#allocation6], 1
    %2140 = vsyncpa %s2139, 1
    %2141 = vsyncpa [#allocation9], 1
    %s2142 = scalar_lea.sflag [#allocation9], 1
    %2143 = vsyncpa %s2142, 1
    %2144 = vsyncpa [#allocation12], 1
    %s2145 = scalar_lea.sflag [#allocation12], 1
    %2146 = vsyncpa %s2145, 1
    %2147 = vsyncpa [#allocation15], 1
    %s2148 = scalar_lea.sflag [#allocation15], 1
    %2149 = vsyncpa %s2148, 1
    %2150 = vsyncpa [#allocation18], 1
    %s2151 = scalar_lea.sflag [#allocation18], 1
    %2152 = vsyncpa %s2151, 1
    %2153 = vsyncpa [#allocation7], 1
    %s2154 = scalar_lea.sflag [#allocation7], 1
    %2155 = vsyncpa %s2154, 1
    %2156 = vsyncpa [#allocation21], 1
  %2157 = vsyncmov [#allocation4]
  %s2158 = vpop.sfrf %2157
  %p2159 = scmp.eq.s32.totalorder %s2158, 0
  %p2160 = pneg %p2159
  %2162 = shalt.err (%p2160)
  %s2163 = scalar_lea.sflag [#allocation4], 1
  %2164 = vsyncmov %s2163
  %s2165 = vpop.sfrf %2164
  %p2166 = scmp.eq.s32.totalorder %s2165, 0
  %p2167 = pneg %p2166
  %2169 = shalt.err (%p2167)

</llo_original>
